<compile_context>
chip_gen: v7x
topology: tpu7x:2x2x1
jax: 0.10.0
libtpu: 0.0.40
codegen_flags: <defaults>
</compile_context>

<pallas_src>
import math

import jax
import jax.numpy as jnp
from jax import lax
from jax.experimental import pallas as pl
from jax.experimental.pallas import tpu as pltpu

ATTN_SCALE = math.sqrt(32.0)
D_MODEL = 32
D_INNER = 64   # Mamba expand * d_model = 2 * 32
D_STATE = 64   # Mamba d_state


# ----------------------------------------------------------------------------
# small in-kernel helpers
# ----------------------------------------------------------------------------
def _layernorm(x, g, b, eps=1e-5):
    mu = jnp.mean(x, axis=-1, keepdims=True)
    var = jnp.mean((x - mu) ** 2, axis=-1, keepdims=True)
    return (x - mu) * lax.rsqrt(var + eps) * g + b


def _gelu(x):
    return 0.5 * x * (1.0 + jnp.tanh(0.7978845608028654 * (x + 0.044715 * x * x * x)))


def _sigmoid(x):
    return 1.0 / (1.0 + jnp.exp(-x))


def _softplus(x):
    # overflow-safe softplus
    return jnp.maximum(x, 0.0) + jnp.log(1.0 + jnp.exp(-jnp.abs(x)))


# ----------------------------------------------------------------------------
# BlockSpec helpers
# ----------------------------------------------------------------------------
def _seq_tile(n, max_tile=512):
    """Largest sequence tile <= max_tile that divides N (full N if small)."""
    if n <= max_tile:
        return n
    for t in range(max_tile, 7, -8):
        if n % t == 0:
            return t
    return n


# grid = (B, N // tn)
def _tok_spec(tn, trailing):
    nz = len(trailing)
    return pl.BlockSpec((1, tn) + tuple(trailing),
                        lambda b, i, _n=nz: (b, i) + (0,) * _n)


def _nbr_spec(k, tn, c):
    return pl.BlockSpec((1, k, tn, c), lambda b, i: (b, 0, i, 0))


def _w_spec2(shape):
    nz = len(shape)
    return pl.BlockSpec(tuple(shape), lambda b, i, _n=nz: (0,) * _n)


# grid = (B,)
def _batch_spec(trailing):
    nz = len(trailing)
    return pl.BlockSpec((1,) + tuple(trailing), lambda b, _n=nz: (b,) + (0,) * _n)


def _w_spec1(shape):
    nz = len(shape)
    return pl.BlockSpec(tuple(shape), lambda b, _n=nz: (0,) * _n)


# ----------------------------------------------------------------------------
# Kernel 1: spatiotemporal embedding + norm1 + local_transformations linear.
# Single lane-dense (tn, 128) output: [F_L (32) | varphi (32) | psi (32) | alpha (32)]
# ----------------------------------------------------------------------------
def embed_kernel(xytp_ref, delta_ref,
                 ew1_ref, eb1_ref, ew2_ref, eb2_ref,
                 wp_ref, bp_ref, wn_ref, bn_ref,
                 wproj_ref, lng_ref, lnb_ref,
                 n1g_ref, n1b_ref, ltw_ref, ltb_ref,
                 out_ref):
    x = xytp_ref[0]                        # (tn, 4)
    d = delta_ref[0]                       # (tn, 18)
    ts = x[:, 0:1]                         # timestamp
    pol = x[:, 3:4]                        # polarity

    # SpatialEmbedding MLP (Linear -> GELU -> Linear)
    h = _gelu(jnp.dot(d, ew1_ref[...], preferred_element_type=jnp.float32) + eb1_ref[...])
    fsp = jnp.dot(h, ew2_ref[...], preferred_element_type=jnp.float32) + eb2_ref[...]

    # TemporalEmbedding: pos/neg linear(1 -> 32) gated by polarity
    fte = (ts * wp_ref[...] + bp_ref[...]) * pol + (ts * wn_ref[...] + bn_ref[...]) * (1.0 - pol)

    # proj(concat([Fsp, Fte])) == Fsp @ Wp[:32] + Fte @ Wp[32:]
    wproj = wproj_ref[...]
    f = (jnp.dot(fsp, wproj[:D_MODEL, :], preferred_element_type=jnp.float32)
         + jnp.dot(fte, wproj[D_MODEL:, :], preferred_element_type=jnp.float32))
    f = _layernorm(f, lng_ref[...], lnb_ref[...])

    # norm1 + local_transformations (32 -> 96) on normed features
    fn = _layernorm(f, n1g_ref[...], n1b_ref[...])
    trans = jnp.dot(fn, ltw_ref[...], preferred_element_type=jnp.float32) + ltb_ref[...]

    out_ref[0] = jnp.concatenate([f, trans], axis=-1)   # lane-dense (tn, 128)


def spatiotemporal_embed(xytp, delta_flat, p):
    B, N, _ = xytp.shape
    tn = _seq_tile(N)
    weights = [p['emb_w1'], p['emb_b1'], p['emb_w2'], p['emb_b2'],
               p['te_wp'], p['te_bp'], p['te_wn'], p['te_bn'],
               p['proj_w'], p['ste_ln_g'], p['ste_ln_b'],
               p['norm1_g'], p['norm1_b'], p['lt_w'], p['lt_b']]
    in_specs = ([_tok_spec(tn, (4,)), _tok_spec(tn, (18,))]
                + [_w_spec2(w.shape) for w in weights])
    return pl.pallas_call(
        embed_kernel,
        grid=(B, N // tn),
        in_specs=in_specs,
        out_specs=_tok_spec(tn, (128,)),
        out_shape=jax.ShapeDtypeStruct((B, N, 128), jnp.float32),
        compiler_params=pltpu.CompilerParams(
            dimension_semantics=("parallel", "parallel")),
    )(xytp, delta_flat, *weights)


# ----------------------------------------------------------------------------
# Kernel 2: LXformer local attention.  Inputs are already in (B, K, N, C)
# layout (gathered that way — no HBM transposes); softmax reduces over K.
# PositionEncoder (4 -> 4 -> 32) is done as VPU broadcast MACs.
# ----------------------------------------------------------------------------
def lxformer_kernel(pe_ref, varphi_ref, psi_ref, alpha_ref,
                    pw1_ref, pb1_ref, bns_ref, bnb_ref, pw2_ref, pb2_ref,
                    lg_ref, lb_ref, out_ref):
    pe = pe_ref[0]                          # (K, tn, 4)

    # linear1 (4->4) + BatchNorm1d(4) [eval] + ReLU as broadcast MACs
    x1 = pb1_ref[...]                       # (1, 4) -> broadcasts
    for i in range(4):
        x1 = x1 + pe[:, :, i:i + 1] * pw1_ref[i:i + 1, :]
    x1 = jnp.maximum(x1 * bns_ref[...] + bnb_ref[...], 0.0)

    # linear2 (4->32) as broadcast MACs
    delta = pb2_ref[...]                    # (1, 32) -> broadcasts
    for i in range(4):
        delta = delta + x1[:, :, i:i + 1] * pw2_ref[i:i + 1, :]

    varphi = varphi_ref[0]                  # (tn, 32)
    psi = psi_ref[0]                        # (K, tn, 32)
    alpha = alpha_ref[0]                    # (K, tn, 32)

    # local_norm affine is pre-scaled by 1/ATTN_SCALE in the wrapper
    logits = _layernorm(varphi[None, :, :] - psi + delta, lg_ref[...], lb_ref[...])
    m = jnp.max(logits, axis=0, keepdims=True)
    e = jnp.exp(logits - m)
    w = e / jnp.sum(e, axis=0, keepdims=True)
    out_ref[0] = jnp.sum(w * (alpha + delta), axis=0)


def lxformer(pe_t, varphi, psi_t, alpha_t, p):
    B, K, N, _ = pe_t.shape
    tn = _seq_tile(N)
    inv = 1.0 / ATTN_SCALE
    weights = [p['pe_w1'], p['pe_b1'], p['pe_bn_s'], p['pe_bn_b'],
               p['pe_w2'], p['pe_b2'],
               p['lln_g'] * inv, p['lln_b'] * inv]
    in_specs = ([_nbr_spec(K, tn, 4), _tok_spec(tn, (32,)),
                 _nbr_spec(K, tn, 32), _nbr_spec(K, tn, 32)]
                + [_w_spec2(w.shape) for w in weights])
    return pl.pallas_call(
        lxformer_kernel,
        grid=(B, N // tn),
        in_specs=in_specs,
        out_specs=_tok_spec(tn, (32,)),
        out_shape=jax.ShapeDtypeStruct((B, N, 32), jnp.float32),
        compiler_params=pltpu.CompilerParams(
            dimension_semantics=("parallel", "parallel")),
    )(pe_t, varphi, psi_t, alpha_t, *weights)


# ----------------------------------------------------------------------------
# Kernel 3: Mamba (in_proj, causal depthwise conv, selective scan, gating,
# out_proj) + residual + norm2 + MLP + residual + head, all fused.
# The selective scan runs in chunks: decay/inp are computed per chunk and the
# C-projection is folded into the chunk loop (no (N, 64, 64) scratches).
# ----------------------------------------------------------------------------
def _make_mamba_head_kernel(chunk):
    def kernel(u_ref, res_ref,
               winx_ref, winz_ref, cw_ref, cb_ref,
               wdteff_ref, bdt_ref, wxb_ref, wxc_ref,
               a_ref, dparam_ref, wout_ref,
               n2g_ref, n2b_ref, mw1_ref, mb1_ref, mw2_ref, mb2_ref,
               wh_ref, bh_ref,
               out_ref, prep_ref, y_ref):
        n = u_ref.shape[1]
        u = u_ref[0]                                                        # (N, 32)
        x = jnp.dot(u, winx_ref[...], preferred_element_type=jnp.float32)   # (N, 64)
        z = jnp.dot(u, winz_ref[...], preferred_element_type=jnp.float32)   # (N, 64)

        # causal depthwise conv1d (kernel=4, padding=3, truncated to N) via
        # shifted copies — no NxN shift-matrix matmuls.
        cw = cw_ref[...]                                                    # (4, 64)
        zrow = jnp.zeros((1, D_INNER), jnp.float32)
        x1 = jnp.concatenate([zrow, x[:n - 1]], axis=0)
        x2 = jnp.concatenate([zrow, zrow, x[:n - 2]], axis=0)
        x3 = jnp.concatenate([zrow, zrow, zrow, x[:n - 3]], axis=0)
        xc = (x * cw[3:4, :] + x1 * cw[2:3, :] + x2 * cw[1:2, :] + x3 * cw[0:1, :]
              + cb_ref[...])
        xc = xc * _sigmoid(xc)                                              # SiLU

        # dt projection pre-folded to one 64x64 matmul in the wrapper
        dt = _softplus(jnp.dot(xc, wdteff_ref[...], preferred_element_type=jnp.float32)
                       + bdt_ref[...])                                      # (N, 64)
        Bm = jnp.dot(xc, wxb_ref[...], preferred_element_type=jnp.float32)  # (N, 64)
        Cm = jnp.dot(xc, wxc_ref[...], preferred_element_type=jnp.float32)  # (N, 64)

        # lane-dense staging buffer for the scan: [dt | dt*xc | B | C]
        prep_ref[:, 0:64] = dt
        prep_ref[:, 64:128] = dt * xc
        prep_ref[:, 128:192] = Bm
        prep_ref[:, 192:256] = Cm

        A = a_ref[...]                                                      # (64, 64)

        def chunk_body(c, h):
            base = pl.multiple_of(c * chunk, chunk)
            blk = prep_ref[pl.ds(base, chunk), :]                           # (chunk, 256)
            dt_c = blk[:, 0:64]
            dtxc_c = blk[:, 64:128]
            bm_c = blk[:, 128:192]
            cm_c = blk[:, 192:256]
            decay_c = jnp.exp(dt_c[:, :, None] * A[None, :, :])             # (chunk, 64, 64)
            inp_c = dtxc_c[:, :, None] * bm_c[:, None, :]                   # (chunk, 64, 64)
            hs = []
            for j in range(chunk):                                          # unrolled scan
                h = decay_c[j] * h + inp_c[j]
                hs.append(h)
            h_stack = jnp.stack(hs, axis=0)                                 # (chunk, 64, 64)
            y_ref[pl.ds(base, chunk), :] = jnp.sum(h_stack * cm_c[:, None, :], axis=2)
            return h

        lax.fori_loop(0, n // chunk, chunk_body,
                      jnp.zeros((D_INNER, D_STATE), jnp.float32))

        y = y_ref[...] + xc * dparam_ref[...]
        y = y * (z * _sigmoid(z))                                           # gate with SiLU(z)
        f_attn = (jnp.dot(y, wout_ref[...], preferred_element_type=jnp.float32)
                  + res_ref[0])                                             # + shortcut

        # norm2 -> MLP -> residual -> head
        fn = _layernorm(f_attn, n2g_ref[...], n2b_ref[...])
        hmlp = _gelu(jnp.dot(fn, mw1_ref[...], preferred_element_type=jnp.float32)
                     + mb1_ref[...])
        mout = jnp.dot(hmlp, mw2_ref[...], preferred_element_type=jnp.float32) + mb2_ref[...]
        fout = mout + f_attn
        out_ref[0] = jnp.dot(fout, wh_ref[...], preferred_element_type=jnp.float32) + bh_ref[...]

    return kernel


def mamba_mlp_head(u, resid, p):
    B, N, C = u.shape
    chunk = 8 if N % 8 == 0 else (4 if N % 4 == 0 else 1)
    wdt_eff = jnp.dot(p['m_wxdt'], p['m_wdt'])                # (64, 64)
    weights = [p['m_winx'], p['m_winz'], p['m_convw'], p['m_convb'],
               wdt_eff, p['m_bdt'], p['m_wxB'], p['m_wxC'],
               p['m_A'], p['m_D'], p['m_wout'],
               p['norm2_g'], p['norm2_b'], p['mlp_w1'], p['mlp_b1'],
               p['mlp_w2'], p['mlp_b2'], p['head_w'], p['head_b']]
    in_specs = ([_batch_spec((N, C)), _batch_spec((N, C))]
                + [_w_spec1(w.shape) for w in weights])
    return pl.pallas_call(
        _make_mamba_head_kernel(chunk),
        grid=(B,),
        in_specs=in_specs,
        out_specs=_batch_spec((N, 1)),
        out_shape=jax.ShapeDtypeStruct((B, N, 1), jnp.float32),
        scratch_shapes=[pltpu.VMEM((N, 256), jnp.float32),   # [dt | dt*xc | B | C]
                        pltpu.VMEM((N, D_INNER), jnp.float32)],  # y
        # no vmem_limit override: working set is tiny now, fits v7x's 64 MiB too
        compiler_params=pltpu.CompilerParams(dimension_semantics=("parallel",)),
    )(u, resid, *weights)


# ----------------------------------------------------------------------------
# JAX glue: neighbor search / gathers (pytorch3d ball_query / knn_points / knn_gather)
# ----------------------------------------------------------------------------
def _pairwise_sqdist(a, b):
    d = a[:, :, None, :] - b[:, None, :, :]
    return jnp.sum(d * d, axis=-1)


def ball_query_idx(pts, radius, K):
    """First-K-within-radius (index order), padded with -1, like pytorch3d.ball_query."""
    # TODO(synk): for large N, replace the dense (B, N, N) distance matrix with a
    # tiled Pallas distance + top-k kernel.
    B, N, _ = pts.shape
    d2 = _pairwise_sqdist(pts, pts)
    within = d2 < radius * radius
    j = jnp.arange(N, dtype=jnp.int32)
    key = jnp.where(within, j[None, None, :], j[None, None, :] + N)
    _, order = lax.top_k(-key, K)          # K smallest keys == first K within radius
    cnt = jnp.sum(within, axis=-1, keepdims=True)
    k_ar = jnp.arange(K)[None, None, :]
    return jnp.where(k_ar < cnt, order, -1)


def knn_idx(pts, K):
    d2 = _pairwise_sqdist(pts, pts)
    _, idx = lax.top_k(-d2, K)             # K nearest (ascending distance)
    return idx


def knn_gather(x, idx):
    """x: (B, N, C); idx: (B, ...) int -> (B, ..., C)."""
    return jax.vmap(lambda xb, ib: xb[ib])(x, idx)


# ----------------------------------------------------------------------------
# parameters
# ----------------------------------------------------------------------------
def init_params(key):
    keys = jax.random.split(key, 40)
    kit = iter(keys)

    def w(shape, scale=0.05):
        return (scale * jax.random.normal(next(kit), shape)).astype(jnp.float32)

    ones = lambda s: jnp.ones(s, jnp.float32)
    zeros = lambda s: jnp.zeros(s, jnp.float32)

    return dict(
        # SpatialEmbedding MLP(18, 64, 32)
        emb_w1=w((18, 64)), emb_b1=w((1, 64)),
        emb_w2=w((64, 32)), emb_b2=w((1, 32)),
        # TemporalEmbedding Linear(1, 32) x2
        te_wp=w((1, 32)), te_bp=w((1, 32)),
        te_wn=w((1, 32)), te_bn=w((1, 32)),
        # proj Linear(64, 32, bias=False) + LayerNorm(32)
        proj_w=w((64, 32)),
        ste_ln_g=ones((1, 32)), ste_ln_b=zeros((1, 32)),
        # block norm1 + LXformer local_transformations Linear(32, 96)
        norm1_g=ones((1, 32)), norm1_b=zeros((1, 32)),
        lt_w=w((32, 96)), lt_b=w((1, 96)),
        # PositionEncoder: Linear(4,4), BatchNorm1d(4) eval stats, Linear(4,32)
        pe_w1=w((4, 4)), pe_b1=w((1, 4)),
        pe_bn_s=jnp.full((1, 4), 1.0 / math.sqrt(1.0 + 1e-5), jnp.float32),
        pe_bn_b=zeros((1, 4)),
        pe_w2=w((4, 32)), pe_b2=w((1, 32)),
        # LXformer local_norm LayerNorm(32)
        lln_g=ones((1, 32)), lln_b=zeros((1, 32)),
        # Mamba(d_model=32, d_state=64, d_conv=4, expand=2), dt_rank=2
        m_winx=w((32, D_INNER)), m_winz=w((32, D_INNER)),
        m_convw=w((4, D_INNER)), m_convb=w((1, D_INNER)),
        m_wxdt=w((D_INNER, 2)), m_wxB=w((D_INNER, D_STATE)), m_wxC=w((D_INNER, D_STATE)),
        m_wdt=w((2, D_INNER)), m_bdt=w((1, D_INNER)),
        m_A=-jnp.broadcast_to(jnp.arange(1, D_STATE + 1, dtype=jnp.float32)[None, :],
                              (D_INNER, D_STATE)),
        m_D=ones((1, D_INNER)),
        m_wout=w((D_INNER, 32)),
        # block norm2 + MLP(32, 128, 32) + head Linear(32, 1)
        norm2_g=ones((1, 32)), norm2_b=zeros((1, 32)),
        mlp_w1=w((32, 128)), mlp_b1=w((1, 128)),
        mlp_w2=w((128, 32)), mlp_b2=w((1, 32)),
        head_w=w((32, 1)), head_b=w((1, 1)),
    )


# ----------------------------------------------------------------------------
# full forward
# ----------------------------------------------------------------------------
def edformer_plus_forward(xytp, p, height=260, width=346, K_sp=9, K_l=16):
    B, N, _ = xytp.shape

    # --- SpatialEmbedding: ball_query on (0, x, y), delta gather (glue) ---
    xyt0 = xytp[..., :3].at[..., 0].set(0.0)
    idx9 = ball_query_idx(xyt0, radius=5.0 / height, K=K_sp)
    self_idx = jnp.broadcast_to(jnp.arange(N)[None, :, None], idx9.shape)
    idx9 = jnp.where(idx9 == -1, self_idx, idx9)
    xy = xytp[..., 1:3]
    delta9 = xy[:, :, None, :] - knn_gather(xy, idx9)           # (B, N, 9, 2)
    delta_flat = delta9.reshape(B, N, K_sp * 2)

    # --- kernel 1: embedding + norm1 + local transformations (lane-dense 128) ---
    emb = spatiotemporal_embed(xytp, delta_flat, p)             # (B, N, 128)
    F_L = emb[..., 0:32]
    varphi = emb[..., 32:64]

    # --- LXformer neighbor search; gather directly into (B, K, N, C) (glue) ---
    idx16 = knn_idx(xytp[..., :3], K_l)                         # (B, N, K)
    idx16_t = jnp.transpose(idx16, (0, 2, 1))                   # tiny int transpose only
    pe_t = xytp[:, None, :, :] - knn_gather(xytp, idx16_t)      # (B, K, N, 4)
    psi_t = knn_gather(emb[..., 64:96], idx16_t)                # (B, K, N, 32)
    alpha_t = knn_gather(emb[..., 96:128], idx16_t)             # (B, K, N, 32)

    # --- kernel 2: local attention ---
    attn_l = lxformer(pe_t, varphi, psi_t, alpha_t, p)          # (B, N, 32)

    # --- kernel 3: Mamba + residual + norm2/MLP/residual + head (fused) ---
    prob = mamba_mlp_head(attn_l, F_L, p)                       # (B, N, 1)
    return prob


if __name__ == "__main__":
    B, N = 2, 64
    HEIGHT, WIDTH = 260, 346

    key = jax.random.PRNGKey(0)
    k_t, k_x, k_y, k_p, k_w = jax.random.split(key, 5)
    t = jnp.sort(jax.random.uniform(k_t, (B, N, 1)), axis=1)
    x = jax.random.uniform(k_x, (B, N, 1)) * 0.2
    y = jax.random.uniform(k_y, (B, N, 1)) * 0.2
    pol = jax.random.bernoulli(k_p, 0.5, (B, N, 1)).astype(jnp.float32)
    xytp = jnp.concatenate([t, x, y, pol], axis=-1).astype(jnp.float32)

    params = init_params(k_w)
    prob = edformer_plus_forward(xytp, params, height=HEIGHT, width=WIDTH)
    prob = jax.block_until_ready(prob)
    assert prob.shape == (B, N, 1) and prob.dtype == jnp.float32
    print("KERNEL_OK")
</pallas_src>

<mosaic_0001>
module attributes {stable_mosaic.version = 11 : i64} {
  func.func @embed_kernel(%arg0: i32, %arg1: i32, %arg2: memref<1x64x4xf32, #tpu.memory_space<vmem>>, %arg3: memref<1x64x18xf32, #tpu.memory_space<vmem>>, %arg4: memref<18x64xf32, #tpu.memory_space<vmem>>, %arg5: memref<1x64xf32, #tpu.memory_space<vmem>>, %arg6: memref<64x32xf32, #tpu.memory_space<vmem>>, %arg7: memref<1x32xf32, #tpu.memory_space<vmem>>, %arg8: memref<1x32xf32, #tpu.memory_space<vmem>>, %arg9: memref<1x32xf32, #tpu.memory_space<vmem>>, %arg10: memref<1x32xf32, #tpu.memory_space<vmem>>, %arg11: memref<1x32xf32, #tpu.memory_space<vmem>>, %arg12: memref<64x32xf32, #tpu.memory_space<vmem>>, %arg13: memref<1x32xf32, #tpu.memory_space<vmem>>, %arg14: memref<1x32xf32, #tpu.memory_space<vmem>>, %arg15: memref<1x32xf32, #tpu.memory_space<vmem>>, %arg16: memref<1x32xf32, #tpu.memory_space<vmem>>, %arg17: memref<32x96xf32, #tpu.memory_space<vmem>>, %arg18: memref<1x96xf32, #tpu.memory_space<vmem>>, %arg19: memref<1x64x128xf32, #tpu.memory_space<vmem>>) attributes {dimension_semantics = [#tpu.dimension_semantics<parallel>, #tpu.dimension_semantics<parallel>], iteration_bounds = array<i64: 2, 1>, scalar_prefetch = 0 : i64, scratch_operands = 0 : i64, tpu.core_type = #tpu.core_type<tc>, window_params = [{transform_indices = @transform_0, window_bounds = array<i64: 1, 64, 4>}, {transform_indices = @transform_1, window_bounds = array<i64: 1, 64, 18>}, {pipeline_mode = #tpu.pipeline_mode<synchronous>, transform_indices = @transform_2, window_bounds = array<i64: 18, 64>}, {pipeline_mode = #tpu.pipeline_mode<synchronous>, transform_indices = @transform_3, window_bounds = array<i64: 1, 64>}, {pipeline_mode = #tpu.pipeline_mode<synchronous>, transform_indices = @transform_4, window_bounds = array<i64: 64, 32>}, {pipeline_mode = #tpu.pipeline_mode<synchronous>, transform_indices = @transform_5, window_bounds = array<i64: 1, 32>}, {pipeline_mode = #tpu.pipeline_mode<synchronous>, transform_indices = @transform_6, window_bounds = array<i64: 1, 32>}, {pipeline_mode = #tpu.pipeline_mode<synchronous>, transform_indices = @transform_7, window_bounds = array<i64: 1, 32>}, {pipeline_mode = #tpu.pipeline_mode<synchronous>, transform_indices = @transform_8, window_bounds = array<i64: 1, 32>}, {pipeline_mode = #tpu.pipeline_mode<synchronous>, transform_indices = @transform_9, window_bounds = array<i64: 1, 32>}, {pipeline_mode = #tpu.pipeline_mode<synchronous>, transform_indices = @transform_10, window_bounds = array<i64: 64, 32>}, {pipeline_mode = #tpu.pipeline_mode<synchronous>, transform_indices = @transform_11, window_bounds = array<i64: 1, 32>}, {pipeline_mode = #tpu.pipeline_mode<synchronous>, transform_indices = @transform_12, window_bounds = array<i64: 1, 32>}, {pipeline_mode = #tpu.pipeline_mode<synchronous>, transform_indices = @transform_13, window_bounds = array<i64: 1, 32>}, {pipeline_mode = #tpu.pipeline_mode<synchronous>, transform_indices = @transform_14, window_bounds = array<i64: 1, 32>}, {pipeline_mode = #tpu.pipeline_mode<synchronous>, transform_indices = @transform_15, window_bounds = array<i64: 32, 96>}, {pipeline_mode = #tpu.pipeline_mode<synchronous>, transform_indices = @transform_16, window_bounds = array<i64: 1, 96>}, {transform_indices = @transform_17, window_bounds = array<i64: 1, 64, 128>}]} {
    %c0 = arith.constant 0 : index
    %c0_0 = arith.constant 0 : index
    %c0_1 = arith.constant 0 : index
    %0 = vector.load %arg2[%c0, %c0_0, %c0_1] : memref<1x64x4xf32, #tpu.memory_space<vmem>>, vector<1x64x4xf32>
    %1 = vector.shape_cast %0 : vector<1x64x4xf32> to vector<64x4xf32>
    %c0_2 = arith.constant 0 : index
    %c0_3 = arith.constant 0 : index
    %c0_4 = arith.constant 0 : index
    %2 = vector.load %arg3[%c0_2, %c0_3, %c0_4] : memref<1x64x18xf32, #tpu.memory_space<vmem>>, vector<1x64x18xf32>
    %3 = vector.shape_cast %2 : vector<1x64x18xf32> to vector<64x18xf32>
    %4 = vector.extract_strided_slice %1 {offsets = [0, 0], sizes = [64, 1], strides = [1, 1]} : vector<64x4xf32> to vector<64x1xf32>
    %5 = vector.extract_strided_slice %1 {offsets = [0, 3], sizes = [64, 1], strides = [1, 1]} : vector<64x4xf32> to vector<64x1xf32>
    %c0_5 = arith.constant 0 : index
    %c0_6 = arith.constant 0 : index
    %6 = vector.load %arg4[%c0_5, %c0_6] : memref<18x64xf32, #tpu.memory_space<vmem>>, vector<18x64xf32>
    %cst = arith.constant dense<0.000000e+00> : vector<64x64xf32>
    %7 = tpu.matmul %3, %6, %cst {dimension_numbers = #tpu.dot_dimension_numbers<[1], [0], [0], [1], [0, 0, 1, 1], [], []>} : vector<64x18xf32>, vector<18x64xf32>, vector<64x64xf32> -> vector<64x64xf32>
    %c0_7 = arith.constant 0 : index
    %c0_8 = arith.constant 0 : index
    %8 = vector.load %arg5[%c0_7, %c0_8] : memref<1x64xf32, #tpu.memory_space<vmem>>, vector<1x64xf32>
    %9 = vector.broadcast %8 : vector<1x64xf32> to vector<64x64xf32>
    %10 = arith.addf %7, %9 : vector<64x64xf32>
    %cst_9 = arith.constant 5.000000e-01 : f32
    %11 = vector.broadcast %cst_9 : f32 to vector<64x64xf32>
    %12 = arith.mulf %11, %10 : vector<64x64xf32>
    %cst_10 = arith.constant 4.471500e-02 : f32
    %13 = vector.broadcast %cst_10 : f32 to vector<64x64xf32>
    %14 = arith.mulf %13, %10 : vector<64x64xf32>
    %15 = arith.mulf %14, %10 : vector<64x64xf32>
    %16 = arith.mulf %15, %10 : vector<64x64xf32>
    %17 = arith.addf %10, %16 : vector<64x64xf32>
    %cst_11 = arith.constant 0.797884583 : f32
    %18 = vector.broadcast %cst_11 : f32 to vector<64x64xf32>
    %19 = arith.mulf %18, %17 : vector<64x64xf32>
    %20 = math.tanh %19 : vector<64x64xf32>
    %cst_12 = arith.constant 1.000000e+00 : f32
    %21 = vector.broadcast %cst_12 : f32 to vector<64x64xf32>
    %22 = arith.addf %21, %20 : vector<64x64xf32>
    %23 = arith.mulf %12, %22 : vector<64x64xf32>
    %c0_13 = arith.constant 0 : index
    %c0_14 = arith.constant 0 : index
    %24 = vector.load %arg6[%c0_13, %c0_14] : memref<64x32xf32, #tpu.memory_space<vmem>>, vector<64x32xf32>
    %cst_15 = arith.constant dense<0.000000e+00> : vector<64x32xf32>
    %25 = tpu.matmul %23, %24, %cst_15 {dimension_numbers = #tpu.dot_dimension_numbers<[1], [0], [0], [1], [0, 0, 1, 1], [], []>} : vector<64x64xf32>, vector<64x32xf32>, vector<64x32xf32> -> vector<64x32xf32>
    %c0_16 = arith.constant 0 : index
    %c0_17 = arith.constant 0 : index
    %26 = vector.load %arg7[%c0_16, %c0_17] : memref<1x32xf32, #tpu.memory_space<vmem>>, vector<1x32xf32>
    %27 = vector.broadcast %26 : vector<1x32xf32> to vector<64x32xf32>
    %28 = arith.addf %25, %27 : vector<64x32xf32>
    %c0_18 = arith.constant 0 : index
    %c0_19 = arith.constant 0 : index
    %29 = vector.load %arg8[%c0_18, %c0_19] : memref<1x32xf32, #tpu.memory_space<vmem>>, vector<1x32xf32>
    %30 = vector.broadcast %4 : vector<64x1xf32> to vector<64x32xf32>
    %31 = vector.broadcast %29 : vector<1x32xf32> to vector<64x32xf32>
    %32 = arith.mulf %30, %31 : vector<64x32xf32>
    %c0_20 = arith.constant 0 : index
    %c0_21 = arith.constant 0 : index
    %33 = vector.load %arg9[%c0_20, %c0_21] : memref<1x32xf32, #tpu.memory_space<vmem>>, vector<1x32xf32>
    %34 = vector.broadcast %33 : vector<1x32xf32> to vector<64x32xf32>
    %35 = arith.addf %32, %34 : vector<64x32xf32>
    %36 = vector.broadcast %5 : vector<64x1xf32> to vector<64x32xf32>
    %37 = arith.mulf %35, %36 : vector<64x32xf32>
    %c0_22 = arith.constant 0 : index
    %c0_23 = arith.constant 0 : index
    %38 = vector.load %arg10[%c0_22, %c0_23] : memref<1x32xf32, #tpu.memory_space<vmem>>, vector<1x32xf32>
    %39 = vector.broadcast %4 : vector<64x1xf32> to vector<64x32xf32>
    %40 = vector.broadcast %38 : vector<1x32xf32> to vector<64x32xf32>
    %41 = arith.mulf %39, %40 : vector<64x32xf32>
    %c0_24 = arith.constant 0 : index
    %c0_25 = arith.constant 0 : index
    %42 = vector.load %arg11[%c0_24, %c0_25] : memref<1x32xf32, #tpu.memory_space<vmem>>, vector<1x32xf32>
    %43 = vector.broadcast %42 : vector<1x32xf32> to vector<64x32xf32>
    %44 = arith.addf %41, %43 : vector<64x32xf32>
    %cst_26 = arith.constant 1.000000e+00 : f32
    %45 = vector.broadcast %cst_26 : f32 to vector<64x1xf32>
    %46 = arith.subf %45, %5 : vector<64x1xf32>
    %47 = vector.broadcast %46 : vector<64x1xf32> to vector<64x32xf32>
    %48 = arith.mulf %44, %47 : vector<64x32xf32>
    %49 = arith.addf %37, %48 : vector<64x32xf32>
    %c0_27 = arith.constant 0 : index
    %c0_28 = arith.constant 0 : index
    %50 = vector.load %arg12[%c0_27, %c0_28] : memref<64x32xf32, #tpu.memory_space<vmem>>, vector<64x32xf32>
    %51 = vector.extract_strided_slice %50 {offsets = [0, 0], sizes = [32, 32], strides = [1, 1]} : vector<64x32xf32> to vector<32x32xf32>
    %cst_29 = arith.constant dense<0.000000e+00> : vector<64x32xf32>
    %52 = tpu.matmul %28, %51, %cst_29 {dimension_numbers = #tpu.dot_dimension_numbers<[1], [0], [0], [1], [0, 0, 1, 1], [], []>} : vector<64x32xf32>, vector<32x32xf32>, vector<64x32xf32> -> vector<64x32xf32>
    %53 = vector.extract_strided_slice %50 {offsets = [32, 0], sizes = [32, 32], strides = [1, 1]} : vector<64x32xf32> to vector<32x32xf32>
    %cst_30 = arith.constant dense<0.000000e+00> : vector<64x32xf32>
    %54 = tpu.matmul %49, %53, %cst_30 {dimension_numbers = #tpu.dot_dimension_numbers<[1], [0], [0], [1], [0, 0, 1, 1], [], []>} : vector<64x32xf32>, vector<32x32xf32>, vector<64x32xf32> -> vector<64x32xf32>
    %55 = arith.addf %52, %54 : vector<64x32xf32>
    %c0_31 = arith.constant 0 : index
    %c0_32 = arith.constant 0 : index
    %56 = vector.load %arg13[%c0_31, %c0_32] : memref<1x32xf32, #tpu.memory_space<vmem>>, vector<1x32xf32>
    %c0_33 = arith.constant 0 : index
    %c0_34 = arith.constant 0 : index
    %57 = vector.load %arg14[%c0_33, %c0_34] : memref<1x32xf32, #tpu.memory_space<vmem>>, vector<1x32xf32>
    %cst_35 = arith.constant dense<0.000000e+00> : vector<64xf32>
    %58 = vector.multi_reduction <add>, %55, %cst_35 [1] : vector<64x32xf32> to vector<64xf32>
    %59 = vector.shape_cast %58 : vector<64xf32> to vector<64x1xf32>
    %cst_36 = arith.constant 3.200000e+01 : f32
    %60 = vector.broadcast %cst_36 : f32 to vector<64x1xf32>
    %61 = arith.divf %59, %60 : vector<64x1xf32>
    %62 = vector.broadcast %61 : vector<64x1xf32> to vector<64x32xf32>
    %63 = arith.subf %55, %62 : vector<64x32xf32>
    %64 = arith.mulf %63, %63 : vector<64x32xf32>
    %cst_37 = arith.constant dense<0.000000e+00> : vector<64xf32>
    %65 = vector.multi_reduction <add>, %64, %cst_37 [1] : vector<64x32xf32> to vector<64xf32>
    %66 = vector.shape_cast %65 : vector<64xf32> to vector<64x1xf32>
    %cst_38 = arith.constant 3.200000e+01 : f32
    %67 = vector.broadcast %cst_38 : f32 to vector<64x1xf32>
    %68 = arith.divf %66, %67 : vector<64x1xf32>
    %69 = vector.broadcast %61 : vector<64x1xf32> to vector<64x32xf32>
    %70 = arith.subf %55, %69 : vector<64x32xf32>
    %cst_39 = arith.constant 9.99999974E-6 : f32
    %71 = vector.broadcast %cst_39 : f32 to vector<64x1xf32>
    %72 = arith.addf %68, %71 : vector<64x1xf32>
    %73 = math.rsqrt %72 : vector<64x1xf32>
    %74 = vector.broadcast %73 : vector<64x1xf32> to vector<64x32xf32>
    %75 = arith.mulf %70, %74 : vector<64x32xf32>
    %76 = vector.broadcast %56 : vector<1x32xf32> to vector<64x32xf32>
    %77 = arith.mulf %75, %76 : vector<64x32xf32>
    %78 = vector.broadcast %57 : vector<1x32xf32> to vector<64x32xf32>
    %79 = arith.addf %77, %78 : vector<64x32xf32>
    %c0_40 = arith.constant 0 : index
    %c0_41 = arith.constant 0 : index
    %80 = vector.load %arg15[%c0_40, %c0_41] : memref<1x32xf32, #tpu.memory_space<vmem>>, vector<1x32xf32>
    %c0_42 = arith.constant 0 : index
    %c0_43 = arith.constant 0 : index
    %81 = vector.load %arg16[%c0_42, %c0_43] : memref<1x32xf32, #tpu.memory_space<vmem>>, vector<1x32xf32>
    %cst_44 = arith.constant dense<0.000000e+00> : vector<64xf32>
    %82 = vector.multi_reduction <add>, %79, %cst_44 [1] : vector<64x32xf32> to vector<64xf32>
    %83 = vector.shape_cast %82 : vector<64xf32> to vector<64x1xf32>
    %cst_45 = arith.constant 3.200000e+01 : f32
    %84 = vector.broadcast %cst_45 : f32 to vector<64x1xf32>
    %85 = arith.divf %83, %84 : vector<64x1xf32>
    %86 = vector.broadcast %85 : vector<64x1xf32> to vector<64x32xf32>
    %87 = arith.subf %79, %86 : vector<64x32xf32>
    %88 = arith.mulf %87, %87 : vector<64x32xf32>
    %cst_46 = arith.constant dense<0.000000e+00> : vector<64xf32>
    %89 = vector.multi_reduction <add>, %88, %cst_46 [1] : vector<64x32xf32> to vector<64xf32>
    %90 = vector.shape_cast %89 : vector<64xf32> to vector<64x1xf32>
    %cst_47 = arith.constant 3.200000e+01 : f32
    %91 = vector.broadcast %cst_47 : f32 to vector<64x1xf32>
    %92 = arith.divf %90, %91 : vector<64x1xf32>
    %93 = vector.broadcast %85 : vector<64x1xf32> to vector<64x32xf32>
    %94 = arith.subf %79, %93 : vector<64x32xf32>
    %cst_48 = arith.constant 9.99999974E-6 : f32
    %95 = vector.broadcast %cst_48 : f32 to vector<64x1xf32>
    %96 = arith.addf %92, %95 : vector<64x1xf32>
    %97 = math.rsqrt %96 : vector<64x1xf32>
    %98 = vector.broadcast %97 : vector<64x1xf32> to vector<64x32xf32>
    %99 = arith.mulf %94, %98 : vector<64x32xf32>
    %100 = vector.broadcast %80 : vector<1x32xf32> to vector<64x32xf32>
    %101 = arith.mulf %99, %100 : vector<64x32xf32>
    %102 = vector.broadcast %81 : vector<1x32xf32> to vector<64x32xf32>
    %103 = arith.addf %101, %102 : vector<64x32xf32>
    %c0_49 = arith.constant 0 : index
    %c0_50 = arith.constant 0 : index
    %104 = vector.load %arg17[%c0_49, %c0_50] : memref<32x96xf32, #tpu.memory_space<vmem>>, vector<32x96xf32>
    %cst_51 = arith.constant dense<0.000000e+00> : vector<64x96xf32>
    %105 = tpu.matmul %103, %104, %cst_51 {dimension_numbers = #tpu.dot_dimension_numbers<[1], [0], [0], [1], [0, 0, 1, 1], [], []>} : vector<64x32xf32>, vector<32x96xf32>, vector<64x96xf32> -> vector<64x96xf32>
    %c0_52 = arith.constant 0 : index
    %c0_53 = arith.constant 0 : index
    %106 = vector.load %arg18[%c0_52, %c0_53] : memref<1x96xf32, #tpu.memory_space<vmem>>, vector<1x96xf32>
    %107 = vector.broadcast %106 : vector<1x96xf32> to vector<64x96xf32>
    %108 = arith.addf %105, %107 : vector<64x96xf32>
    %109 = tpu.concatenate %79, %108 in 1 : vector<64x32xf32>, vector<64x96xf32> -> vector<64x128xf32>
    %c0_54 = arith.constant 0 : index
    %c0_55 = arith.constant 0 : index
    %c0_56 = arith.constant 0 : index
    %110 = vector.load %arg19[%c0_54, %c0_55, %c0_56] : memref<1x64x128xf32, #tpu.memory_space<vmem>>, vector<1x64x128xf32>
    %111 = vector.shape_cast %110 : vector<1x64x128xf32> to vector<64x128xf32>
    %112 = vector.shape_cast %109 : vector<64x128xf32> to vector<1x64x128xf32>
    tpu.vector_store %arg19[%c0_54, %c0_55, %c0_56], %112 {strides = array<i32>} : memref<1x64x128xf32, #tpu.memory_space<vmem>>, vector<1x64x128xf32>,
    return
  }
  func.func @transform_0(%arg0: i32, %arg1: i32) -> (i32, i32, i32) {
    %c0_i32 = arith.constant 0 : i32
    %c0_i32_0 = arith.constant 0 : i32
    return %arg0, %arg1, %c0_i32 : i32, i32, i32
  }
  func.func @transform_1(%arg0: i32, %arg1: i32) -> (i32, i32, i32) {
    %c0_i32 = arith.constant 0 : i32
    %c0_i32_0 = arith.constant 0 : i32
    return %arg0, %arg1, %c0_i32 : i32, i32, i32
  }
  func.func @transform_2(%arg0: i32, %arg1: i32) -> (i32, i32) {
    %c0_i32 = arith.constant 0 : i32
    %c0_i32_0 = arith.constant 0 : i32
    %c0_i32_1 = arith.constant 0 : i32
    return %c0_i32, %c0_i32_0 : i32, i32
  }
  func.func @transform_3(%arg0: i32, %arg1: i32) -> (i32, i32) {
    %c0_i32 = arith.constant 0 : i32
    %c0_i32_0 = arith.constant 0 : i32
    %c0_i32_1 = arith.constant 0 : i32
    return %c0_i32, %c0_i32_0 : i32, i32
  }
  func.func @transform_4(%arg0: i32, %arg1: i32) -> (i32, i32) {
    %c0_i32 = arith.constant 0 : i32
    %c0_i32_0 = arith.constant 0 : i32
    %c0_i32_1 = arith.constant 0 : i32
    return %c0_i32, %c0_i32_0 : i32, i32
  }
  func.func @transform_5(%arg0: i32, %arg1: i32) -> (i32, i32) {
    %c0_i32 = arith.constant 0 : i32
    %c0_i32_0 = arith.constant 0 : i32
    %c0_i32_1 = arith.constant 0 : i32
    return %c0_i32, %c0_i32_0 : i32, i32
  }
  func.func @transform_6(%arg0: i32, %arg1: i32) -> (i32, i32) {
    %c0_i32 = arith.constant 0 : i32
    %c0_i32_0 = arith.constant 0 : i32
    %c0_i32_1 = arith.constant 0 : i32
    return %c0_i32, %c0_i32_0 : i32, i32
  }
  func.func @transform_7(%arg0: i32, %arg1: i32) -> (i32, i32) {
    %c0_i32 = arith.constant 0 : i32
    %c0_i32_0 = arith.constant 0 : i32
    %c0_i32_1 = arith.constant 0 : i32
    return %c0_i32, %c0_i32_0 : i32, i32
  }
  func.func @transform_8(%arg0: i32, %arg1: i32) -> (i32, i32) {
    %c0_i32 = arith.constant 0 : i32
    %c0_i32_0 = arith.constant 0 : i32
    %c0_i32_1 = arith.constant 0 : i32
    return %c0_i32, %c0_i32_0 : i32, i32
  }
  func.func @transform_9(%arg0: i32, %arg1: i32) -> (i32, i32) {
    %c0_i32 = arith.constant 0 : i32
    %c0_i32_0 = arith.constant 0 : i32
    %c0_i32_1 = arith.constant 0 : i32
    return %c0_i32, %c0_i32_0 : i32, i32
  }
  func.func @transform_10(%arg0: i32, %arg1: i32) -> (i32, i32) {
    %c0_i32 = arith.constant 0 : i32
    %c0_i32_0 = arith.constant 0 : i32
    %c0_i32_1 = arith.constant 0 : i32
    return %c0_i32, %c0_i32_0 : i32, i32
  }
  func.func @transform_11(%arg0: i32, %arg1: i32) -> (i32, i32) {
    %c0_i32 = arith.constant 0 : i32
    %c0_i32_0 = arith.constant 0 : i32
    %c0_i32_1 = arith.constant 0 : i32
    return %c0_i32, %c0_i32_0 : i32, i32
  }
  func.func @transform_12(%arg0: i32, %arg1: i32) -> (i32, i32) {
    %c0_i32 = arith.constant 0 : i32
    %c0_i32_0 = arith.constant 0 : i32
    %c0_i32_1 = arith.constant 0 : i32
    return %c0_i32, %c0_i32_0 : i32, i32
  }
  func.func @transform_13(%arg0: i32, %arg1: i32) -> (i32, i32) {
    %c0_i32 = arith.constant 0 : i32
    %c0_i32_0 = arith.constant 0 : i32
    %c0_i32_1 = arith.constant 0 : i32
    return %c0_i32, %c0_i32_0 : i32, i32
  }
  func.func @transform_14(%arg0: i32, %arg1: i32) -> (i32, i32) {
    %c0_i32 = arith.constant 0 : i32
    %c0_i32_0 = arith.constant 0 : i32
    %c0_i32_1 = arith.constant 0 : i32
    return %c0_i32, %c0_i32_0 : i32, i32
  }
  func.func @transform_15(%arg0: i32, %arg1: i32) -> (i32, i32) {
    %c0_i32 = arith.constant 0 : i32
    %c0_i32_0 = arith.constant 0 : i32
    %c0_i32_1 = arith.constant 0 : i32
    return %c0_i32, %c0_i32_0 : i32, i32
  }
  func.func @transform_16(%arg0: i32, %arg1: i32) -> (i32, i32) {
    %c0_i32 = arith.constant 0 : i32
    %c0_i32_0 = arith.constant 0 : i32
    %c0_i32_1 = arith.constant 0 : i32
    return %c0_i32, %c0_i32_0 : i32, i32
  }
  func.func @transform_17(%arg0: i32, %arg1: i32) -> (i32, i32, i32) {
    %c0_i32 = arith.constant 0 : i32
    %c0_i32_0 = arith.constant 0 : i32
    return %arg0, %arg1, %c0_i32 : i32, i32, i32
  }
}

</mosaic_0001>

<llo_original>
// kernel: tpu_custom_call.1
$region0: #{tpu_custom_call.1}
  #allocation0 [shape = 'u32[]', space=smem, size = 0x4, offset = 0x4, fixed_abs, tag = 'smem constant byte address 0x4 - core index']
  #allocation1 [shape = 'u32[144,128]{1,0:T(1,128)}', space=vmem, size = 0x12000, scoped, tag = 'internal scratch']
  %s0 = inlined_call_operand.vmem [shape: f32[2,64,4], index: 0, kind: input, shape index: {}]
  %s1 = inlined_call_operand.vmem [shape: f32[2,64,18], index: 1, kind: input, shape index: {}]
  %s2 = inlined_call_operand.vmem [shape: f32[18,64], index: 2, kind: input, shape index: {}]
  %s3 = inlined_call_operand.vmem [shape: f32[1,64], index: 3, kind: input, shape index: {}]
  %s4 = inlined_call_operand.vmem [shape: f32[64,32], index: 4, kind: input, shape index: {}]
  %s5 = inlined_call_operand.vmem [shape: f32[1,32], index: 5, kind: input, shape index: {}]
  %s6 = inlined_call_operand.vmem [shape: f32[1,32], index: 6, kind: input, shape index: {}]
  %s7 = inlined_call_operand.vmem [shape: f32[1,32], index: 7, kind: input, shape index: {}]
  %s8 = inlined_call_operand.vmem [shape: f32[1,32], index: 8, kind: input, shape index: {}]
  %s9 = inlined_call_operand.vmem [shape: f32[1,32], index: 9, kind: input, shape index: {}]
  %s10 = inlined_call_operand.vmem [shape: f32[64,32], index: 10, kind: input, shape index: {}]
  %s11 = inlined_call_operand.vmem [shape: f32[1,32], index: 11, kind: input, shape index: {}]
  %s12 = inlined_call_operand.vmem [shape: f32[1,32], index: 12, kind: input, shape index: {}]
  %s13 = inlined_call_operand.vmem [shape: f32[1,32], index: 13, kind: input, shape index: {}]
  %s14 = inlined_call_operand.vmem [shape: f32[1,32], index: 14, kind: input, shape index: {}]
  %s15 = inlined_call_operand.vmem [shape: f32[32,96], index: 15, kind: input, shape index: {}]
  %s16 = inlined_call_operand.vmem [shape: f32[1,96], index: 16, kind: input, shape index: {}]
  %s17 = inlined_call_operand.hbm [shape: f32[2,64,128], index: 17, kind: output, shape index: {}]
  %s18 = sld [smem:[#allocation0]]
  $region101: #{tpu_custom_call.1} parent=0
    _
  %s20 = ssub.s32 1, %s18
  %s21 = scalar_select 0, %s20, %s18
  $region1: #{tpu_custom_call.1} parent=0
    #allocation2 [shape = 'u8[65536]{0}', space=vmem, size = 0x10000, scoped, tag = 'output window, operand 0']
    #allocation3 [shape = 's32[2]{0}', space=sflag, size = 0x8, scoped, tag = 'scoped memory for tpu_custom_call.1']
    %22 = vsyncpa [#allocation3], 0
    %s23 = scalar_lea.sflag [#allocation3], 1
    %24 = vsyncpa %s23, 0
    loop: start=0, step=1, limit=4
    $region2: #{tpu_custom_call.1} parent=1 // loop_pre_header
      _
    $region3: #{tpu_custom_call.1} parent=1 // loop_header
      %s26 = sphi 0, %s30
      %p27 = scmp.ge.s32.totalorder %s26, 4
      %s33 = sphi 0, %s45
      %s34 = sphi 0, %s41
      %s35 = sphi 0, %s33
      %s36 = sphi 0, %s34
      %s37 = sphi 0, %s35
      %s38 = sphi 0, %s36
      %s50 = sphi 0, %s52
      %s53 = sphi 0, %s50
      %s54 = sphi 0, %s53
      %s70 = sphi 0, %s54
      %s78 = sphi 0, %s80
      %s81 = sphi 0, %s78
      %s82 = sphi 0, %s81
      %s98 = sphi 0, %s82
      %s102 = sphi 0, %s102
      %s104 = sphi 0, %s102
      %s105 = sphi 0, %s104
      %s119 = sphi 0, %s105
      %s123 = sphi 0, %s123
      %s125 = sphi 0, %s123
      %s126 = sphi 0, %s125
      %s140 = sphi 0, %s126
      %s144 = sphi 0, %s144
      %s146 = sphi 0, %s144
      %s147 = sphi 0, %s146
      %s161 = sphi 0, %s147
      %s165 = sphi 0, %s165
      %s167 = sphi 0, %s165
      %s168 = sphi 0, %s167
      %s182 = sphi 0, %s168
      %s186 = sphi 0, %s186
      %s188 = sphi 0, %s186
      %s189 = sphi 0, %s188
      %s203 = sphi 0, %s189
      %s207 = sphi 0, %s207
      %s209 = sphi 0, %s207
      %s210 = sphi 0, %s209
      %s224 = sphi 0, %s210
      %s228 = sphi 0, %s228
      %s230 = sphi 0, %s228
      %s231 = sphi 0, %s230
      %s245 = sphi 0, %s231
      %s249 = sphi 0, %s249
      %s251 = sphi 0, %s249
      %s252 = sphi 0, %s251
      %s266 = sphi 0, %s252
      %s270 = sphi 0, %s270
      %s272 = sphi 0, %s270
      %s273 = sphi 0, %s272
      %s287 = sphi 0, %s273
      %s291 = sphi 0, %s291
      %s293 = sphi 0, %s291
      %s294 = sphi 0, %s293
      %s308 = sphi 0, %s294
      %s312 = sphi 0, %s312
      %s314 = sphi 0, %s312
      %s315 = sphi 0, %s314
      %s329 = sphi 0, %s315
      %s333 = sphi 0, %s333
      %s335 = sphi 0, %s333
      %s336 = sphi 0, %s335
      %s350 = sphi 0, %s336
      %s354 = sphi 0, %s354
      %s356 = sphi 0, %s354
      %s357 = sphi 0, %s356
      %s371 = sphi 0, %s357
      %s375 = sphi 0, %s375
      %s377 = sphi 0, %s375
      %s378 = sphi 0, %s377
      %s392 = sphi 0, %s378
      %s396 = sphi 0, %s396
      %s398 = sphi 0, %s396
      %s399 = sphi 0, %s398
      %s413 = sphi 0, %s399
      %s421 = sphi 0, %s423
      %s424 = sphi 0, %s421
      %s425 = sphi 0, %s424
      %s441 = sphi 0, %s425
    $region4: #{tpu_custom_call.1} parent=1 // loop_header_branch
      %29 = sbr.rel (%p27) target = $region8
    $region5: #{tpu_custom_call.1} parent=1 // loop_body
      %s31 = ssub.s32 %s26, 1
      %s32 = ssub.s32 %s26, 2
      %s39 = sadd.s32 1, %s34
      %p40 = scmp.ge.s32.totalorder %s39, 1
      %s41 = scalar_select %p40, 0, %s39
      %s42 = sadd.s32 1, %s33
      %s43 = scalar_select %p40, %s42, %s33
      %p44 = scmp.ge.s32.totalorder %s43, 2
      %s45 = scalar_select %p44, 0, %s43
      %s46 = ssub.s32 %s33, %s45
      %s47 = ssub.s32 %s34, %s41
      %s48 = sor.u32 %s46, %s47
      %p49 = scmp.eq.s32.totalorder %s48, 0
      %s51 = sadd.s32 %s50, 1
      %s52 = scalar_select %p49, %s50, %s51
      %p55 = pneg %p49
      %p56 = scmp.eq.s32.totalorder %s26, 1
      %p57 = por %p55, %p56
      %p58 = scmp.ne.s32.totalorder %s50, %s53
      %p59 = scmp.eq.s32.totalorder %s26, 0
      %p60 = por %p58, %p59
      %p61 = scmp.ne.s32.totalorder %s50, %s53
      %p62 = scmp.eq.s32.totalorder %s31, 1
      %p63 = por %p61, %p62
      %p64 = scmp.ne.s32.totalorder %s53, %s54
      %p65 = scmp.eq.s32.totalorder %s31, 0
      %p66 = por %p64, %p65
      %p67 = scmp.ne.s32.totalorder %s53, %s54
      %p68 = scmp.eq.s32.totalorder %s32, 1
      %p69 = por %p67, %p68
      %p71 = scmp.ne.s32.totalorder %s54, %s70
      %p72 = scmp.eq.s32.totalorder %s32, 0
      %p73 = por %p71, %p72
      %s74 = ssub.s32 %s33, %s45
      %s75 = ssub.s32 %s34, %s41
      %s76 = sor.u32 %s74, %s75
      %p77 = scmp.eq.s32.totalorder %s76, 0
      %s79 = sadd.s32 %s78, 1
      %s80 = scalar_select %p77, %s78, %s79
      %p83 = pneg %p77
      %p84 = scmp.eq.s32.totalorder %s26, 1
      %p85 = por %p83, %p84
      %p86 = scmp.ne.s32.totalorder %s78, %s81
      %p87 = scmp.eq.s32.totalorder %s26, 0
      %p88 = por %p86, %p87
      %p89 = scmp.ne.s32.totalorder %s78, %s81
      %p90 = scmp.eq.s32.totalorder %s31, 1
      %p91 = por %p89, %p90
      %p92 = scmp.ne.s32.totalorder %s81, %s82
      %p93 = scmp.eq.s32.totalorder %s31, 0
      %p94 = por %p92, %p93
      %p95 = scmp.ne.s32.totalorder %s81, %s82
      %p96 = scmp.eq.s32.totalorder %s32, 1
      %p97 = por %p95, %p96
      %p99 = scmp.ne.s32.totalorder %s82, %s98
      %p100 = scmp.eq.s32.totalorder %s32, 0
      %p101 = por %p99, %p100
      %s103 = sadd.s32 %s102, 1
      %p106 = scmp.eq.s32.totalorder %s26, 1
      %p107 = scmp.ne.s32.totalorder %s102, %s104
      %p108 = scmp.eq.s32.totalorder %s26, 0
      %p109 = por %p107, %p108
      %p110 = scmp.ne.s32.totalorder %s102, %s104
      %p111 = scmp.eq.s32.totalorder %s31, 1
      %p112 = por %p110, %p111
      %p113 = scmp.ne.s32.totalorder %s104, %s105
      %p114 = scmp.eq.s32.totalorder %s31, 0
      %p115 = por %p113, %p114
      %p116 = scmp.ne.s32.totalorder %s104, %s105
      %p117 = scmp.eq.s32.totalorder %s32, 1
      %p118 = por %p116, %p117
      %p120 = scmp.ne.s32.totalorder %s105, %s119
      %p121 = scmp.eq.s32.totalorder %s32, 0
      %p122 = por %p120, %p121
      %s124 = sadd.s32 %s123, 1
      %p127 = scmp.eq.s32.totalorder %s26, 1
      %p128 = scmp.ne.s32.totalorder %s123, %s125
      %p129 = scmp.eq.s32.totalorder %s26, 0
      %p130 = por %p128, %p129
      %p131 = scmp.ne.s32.totalorder %s123, %s125
      %p132 = scmp.eq.s32.totalorder %s31, 1
      %p133 = por %p131, %p132
      %p134 = scmp.ne.s32.totalorder %s125, %s126
      %p135 = scmp.eq.s32.totalorder %s31, 0
      %p136 = por %p134, %p135
      %p137 = scmp.ne.s32.totalorder %s125, %s126
      %p138 = scmp.eq.s32.totalorder %s32, 1
      %p139 = por %p137, %p138
      %p141 = scmp.ne.s32.totalorder %s126, %s140
      %p142 = scmp.eq.s32.totalorder %s32, 0
      %p143 = por %p141, %p142
      %s145 = sadd.s32 %s144, 1
      %p148 = scmp.eq.s32.totalorder %s26, 1
      %p149 = scmp.ne.s32.totalorder %s144, %s146
      %p150 = scmp.eq.s32.totalorder %s26, 0
      %p151 = por %p149, %p150
      %p152 = scmp.ne.s32.totalorder %s144, %s146
      %p153 = scmp.eq.s32.totalorder %s31, 1
      %p154 = por %p152, %p153
      %p155 = scmp.ne.s32.totalorder %s146, %s147
      %p156 = scmp.eq.s32.totalorder %s31, 0
      %p157 = por %p155, %p156
      %p158 = scmp.ne.s32.totalorder %s146, %s147
      %p159 = scmp.eq.s32.totalorder %s32, 1
      %p160 = por %p158, %p159
      %p162 = scmp.ne.s32.totalorder %s147, %s161
      %p163 = scmp.eq.s32.totalorder %s32, 0
      %p164 = por %p162, %p163
      %s166 = sadd.s32 %s165, 1
      %p169 = scmp.eq.s32.totalorder %s26, 1
      %p170 = scmp.ne.s32.totalorder %s165, %s167
      %p171 = scmp.eq.s32.totalorder %s26, 0
      %p172 = por %p170, %p171
      %p173 = scmp.ne.s32.totalorder %s165, %s167
      %p174 = scmp.eq.s32.totalorder %s31, 1
      %p175 = por %p173, %p174
      %p176 = scmp.ne.s32.totalorder %s167, %s168
      %p177 = scmp.eq.s32.totalorder %s31, 0
      %p178 = por %p176, %p177
      %p179 = scmp.ne.s32.totalorder %s167, %s168
      %p180 = scmp.eq.s32.totalorder %s32, 1
      %p181 = por %p179, %p180
      %p183 = scmp.ne.s32.totalorder %s168, %s182
      %p184 = scmp.eq.s32.totalorder %s32, 0
      %p185 = por %p183, %p184
      %s187 = sadd.s32 %s186, 1
      %p190 = scmp.eq.s32.totalorder %s26, 1
      %p191 = scmp.ne.s32.totalorder %s186, %s188
      %p192 = scmp.eq.s32.totalorder %s26, 0
      %p193 = por %p191, %p192
      %p194 = scmp.ne.s32.totalorder %s186, %s188
      %p195 = scmp.eq.s32.totalorder %s31, 1
      %p196 = por %p194, %p195
      %p197 = scmp.ne.s32.totalorder %s188, %s189
      %p198 = scmp.eq.s32.totalorder %s31, 0
      %p199 = por %p197, %p198
      %p200 = scmp.ne.s32.totalorder %s188, %s189
      %p201 = scmp.eq.s32.totalorder %s32, 1
      %p202 = por %p200, %p201
      %p204 = scmp.ne.s32.totalorder %s189, %s203
      %p205 = scmp.eq.s32.totalorder %s32, 0
      %p206 = por %p204, %p205
      %s208 = sadd.s32 %s207, 1
      %p211 = scmp.eq.s32.totalorder %s26, 1
      %p212 = scmp.ne.s32.totalorder %s207, %s209
      %p213 = scmp.eq.s32.totalorder %s26, 0
      %p214 = por %p212, %p213
      %p215 = scmp.ne.s32.totalorder %s207, %s209
      %p216 = scmp.eq.s32.totalorder %s31, 1
      %p217 = por %p215, %p216
      %p218 = scmp.ne.s32.totalorder %s209, %s210
      %p219 = scmp.eq.s32.totalorder %s31, 0
      %p220 = por %p218, %p219
      %p221 = scmp.ne.s32.totalorder %s209, %s210
      %p222 = scmp.eq.s32.totalorder %s32, 1
      %p223 = por %p221, %p222
      %p225 = scmp.ne.s32.totalorder %s210, %s224
      %p226 = scmp.eq.s32.totalorder %s32, 0
      %p227 = por %p225, %p226
      %s229 = sadd.s32 %s228, 1
      %p232 = scmp.eq.s32.totalorder %s26, 1
      %p233 = scmp.ne.s32.totalorder %s228, %s230
      %p234 = scmp.eq.s32.totalorder %s26, 0
      %p235 = por %p233, %p234
      %p236 = scmp.ne.s32.totalorder %s228, %s230
      %p237 = scmp.eq.s32.totalorder %s31, 1
      %p238 = por %p236, %p237
      %p239 = scmp.ne.s32.totalorder %s230, %s231
      %p240 = scmp.eq.s32.totalorder %s31, 0
      %p241 = por %p239, %p240
      %p242 = scmp.ne.s32.totalorder %s230, %s231
      %p243 = scmp.eq.s32.totalorder %s32, 1
      %p244 = por %p242, %p243
      %p246 = scmp.ne.s32.totalorder %s231, %s245
      %p247 = scmp.eq.s32.totalorder %s32, 0
      %p248 = por %p246, %p247
      %s250 = sadd.s32 %s249, 1
      %p253 = scmp.eq.s32.totalorder %s26, 1
      %p254 = scmp.ne.s32.totalorder %s249, %s251
      %p255 = scmp.eq.s32.totalorder %s26, 0
      %p256 = por %p254, %p255
      %p257 = scmp.ne.s32.totalorder %s249, %s251
      %p258 = scmp.eq.s32.totalorder %s31, 1
      %p259 = por %p257, %p258
      %p260 = scmp.ne.s32.totalorder %s251, %s252
      %p261 = scmp.eq.s32.totalorder %s31, 0
      %p262 = por %p260, %p261
      %p263 = scmp.ne.s32.totalorder %s251, %s252
      %p264 = scmp.eq.s32.totalorder %s32, 1
      %p265 = por %p263, %p264
      %p267 = scmp.ne.s32.totalorder %s252, %s266
      %p268 = scmp.eq.s32.totalorder %s32, 0
      %p269 = por %p267, %p268
      %s271 = sadd.s32 %s270, 1
      %p274 = scmp.eq.s32.totalorder %s26, 1
      %p275 = scmp.ne.s32.totalorder %s270, %s272
      %p276 = scmp.eq.s32.totalorder %s26, 0
      %p277 = por %p275, %p276
      %p278 = scmp.ne.s32.totalorder %s270, %s272
      %p279 = scmp.eq.s32.totalorder %s31, 1
      %p280 = por %p278, %p279
      %p281 = scmp.ne.s32.totalorder %s272, %s273
      %p282 = scmp.eq.s32.totalorder %s31, 0
      %p283 = por %p281, %p282
      %p284 = scmp.ne.s32.totalorder %s272, %s273
      %p285 = scmp.eq.s32.totalorder %s32, 1
      %p286 = por %p284, %p285
      %p288 = scmp.ne.s32.totalorder %s273, %s287
      %p289 = scmp.eq.s32.totalorder %s32, 0
      %p290 = por %p288, %p289
      %s292 = sadd.s32 %s291, 1
      %p295 = scmp.eq.s32.totalorder %s26, 1
      %p296 = scmp.ne.s32.totalorder %s291, %s293
      %p297 = scmp.eq.s32.totalorder %s26, 0
      %p298 = por %p296, %p297
      %p299 = scmp.ne.s32.totalorder %s291, %s293
      %p300 = scmp.eq.s32.totalorder %s31, 1
      %p301 = por %p299, %p300
      %p302 = scmp.ne.s32.totalorder %s293, %s294
      %p303 = scmp.eq.s32.totalorder %s31, 0
      %p304 = por %p302, %p303
      %p305 = scmp.ne.s32.totalorder %s293, %s294
      %p306 = scmp.eq.s32.totalorder %s32, 1
      %p307 = por %p305, %p306
      %p309 = scmp.ne.s32.totalorder %s294, %s308
      %p310 = scmp.eq.s32.totalorder %s32, 0
      %p311 = por %p309, %p310
      %s313 = sadd.s32 %s312, 1
      %p316 = scmp.eq.s32.totalorder %s26, 1
      %p317 = scmp.ne.s32.totalorder %s312, %s314
      %p318 = scmp.eq.s32.totalorder %s26, 0
      %p319 = por %p317, %p318
      %p320 = scmp.ne.s32.totalorder %s312, %s314
      %p321 = scmp.eq.s32.totalorder %s31, 1
      %p322 = por %p320, %p321
      %p323 = scmp.ne.s32.totalorder %s314, %s315
      %p324 = scmp.eq.s32.totalorder %s31, 0
      %p325 = por %p323, %p324
      %p326 = scmp.ne.s32.totalorder %s314, %s315
      %p327 = scmp.eq.s32.totalorder %s32, 1
      %p328 = por %p326, %p327
      %p330 = scmp.ne.s32.totalorder %s315, %s329
      %p331 = scmp.eq.s32.totalorder %s32, 0
      %p332 = por %p330, %p331
      %s334 = sadd.s32 %s333, 1
      %p337 = scmp.eq.s32.totalorder %s26, 1
      %p338 = scmp.ne.s32.totalorder %s333, %s335
      %p339 = scmp.eq.s32.totalorder %s26, 0
      %p340 = por %p338, %p339
      %p341 = scmp.ne.s32.totalorder %s333, %s335
      %p342 = scmp.eq.s32.totalorder %s31, 1
      %p343 = por %p341, %p342
      %p344 = scmp.ne.s32.totalorder %s335, %s336
      %p345 = scmp.eq.s32.totalorder %s31, 0
      %p346 = por %p344, %p345
      %p347 = scmp.ne.s32.totalorder %s335, %s336
      %p348 = scmp.eq.s32.totalorder %s32, 1
      %p349 = por %p347, %p348
      %p351 = scmp.ne.s32.totalorder %s336, %s350
      %p352 = scmp.eq.s32.totalorder %s32, 0
      %p353 = por %p351, %p352
      %s355 = sadd.s32 %s354, 1
      %p358 = scmp.eq.s32.totalorder %s26, 1
      %p359 = scmp.ne.s32.totalorder %s354, %s356
      %p360 = scmp.eq.s32.totalorder %s26, 0
      %p361 = por %p359, %p360
      %p362 = scmp.ne.s32.totalorder %s354, %s356
      %p363 = scmp.eq.s32.totalorder %s31, 1
      %p364 = por %p362, %p363
      %p365 = scmp.ne.s32.totalorder %s356, %s357
      %p366 = scmp.eq.s32.totalorder %s31, 0
      %p367 = por %p365, %p366
      %p368 = scmp.ne.s32.totalorder %s356, %s357
      %p369 = scmp.eq.s32.totalorder %s32, 1
      %p370 = por %p368, %p369
      %p372 = scmp.ne.s32.totalorder %s357, %s371
      %p373 = scmp.eq.s32.totalorder %s32, 0
      %p374 = por %p372, %p373
      %s376 = sadd.s32 %s375, 1
      %p379 = scmp.eq.s32.totalorder %s26, 1
      %p380 = scmp.ne.s32.totalorder %s375, %s377
      %p381 = scmp.eq.s32.totalorder %s26, 0
      %p382 = por %p380, %p381
      %p383 = scmp.ne.s32.totalorder %s375, %s377
      %p384 = scmp.eq.s32.totalorder %s31, 1
      %p385 = por %p383, %p384
      %p386 = scmp.ne.s32.totalorder %s377, %s378
      %p387 = scmp.eq.s32.totalorder %s31, 0
      %p388 = por %p386, %p387
      %p389 = scmp.ne.s32.totalorder %s377, %s378
      %p390 = scmp.eq.s32.totalorder %s32, 1
      %p391 = por %p389, %p390
      %p393 = scmp.ne.s32.totalorder %s378, %s392
      %p394 = scmp.eq.s32.totalorder %s32, 0
      %p395 = por %p393, %p394
      %s397 = sadd.s32 %s396, 1
      %p400 = scmp.eq.s32.totalorder %s26, 1
      %p401 = scmp.ne.s32.totalorder %s396, %s398
      %p402 = scmp.eq.s32.totalorder %s26, 0
      %p403 = por %p401, %p402
      %p404 = scmp.ne.s32.totalorder %s396, %s398
      %p405 = scmp.eq.s32.totalorder %s31, 1
      %p406 = por %p404, %p405
      %p407 = scmp.ne.s32.totalorder %s398, %s399
      %p408 = scmp.eq.s32.totalorder %s31, 0
      %p409 = por %p407, %p408
      %p410 = scmp.ne.s32.totalorder %s398, %s399
      %p411 = scmp.eq.s32.totalorder %s32, 1
      %p412 = por %p410, %p411
      %p414 = scmp.ne.s32.totalorder %s399, %s413
      %p415 = scmp.eq.s32.totalorder %s32, 0
      %p416 = por %p414, %p415
      %s417 = ssub.s32 %s33, %s45
      %s418 = ssub.s32 %s34, %s41
      %s419 = sor.u32 %s417, %s418
      %p420 = scmp.eq.s32.totalorder %s419, 0
      %s422 = sadd.s32 %s421, 1
      %s423 = scalar_select %p420, %s421, %s422
      %p426 = pneg %p420
      %p427 = scmp.eq.s32.totalorder %s26, 1
      %p428 = por %p426, %p427
      %p429 = scmp.ne.s32.totalorder %s421, %s424
      %p430 = scmp.eq.s32.totalorder %s26, 0
      %p431 = por %p429, %p430
      %p432 = scmp.ne.s32.totalorder %s421, %s424
      %p433 = scmp.eq.s32.totalorder %s31, 1
      %p434 = por %p432, %p433
      %p435 = scmp.ne.s32.totalorder %s424, %s425
      %p436 = scmp.eq.s32.totalorder %s31, 0
      %p437 = por %p435, %p436
      %p438 = scmp.ne.s32.totalorder %s424, %s425
      %p439 = scmp.eq.s32.totalorder %s32, 1
      %p440 = por %p438, %p439
      %p442 = scmp.ne.s32.totalorder %s425, %s441
      %p443 = scmp.eq.s32.totalorder %s32, 0
      %p444 = por %p442, %p443
      %p445 = scmp.le.s32.totalorder 1, %s26
      %p446 = scmp.lt.s32.totalorder %s26, 3
      %p447 = pnand %p445, %p446
      %p448 = pneg %p447
      // Predicated region
      $region9: #{tpu_custom_call.1} parent=5 // pred_check
        _
      $region10: #{tpu_custom_call.1} parent=5 // pred_check_branch
        %450 = sbr.rel (%p447) target = $region12
      $region11: #{tpu_custom_call.1} parent=5 // pred_region
        %s451 = ssub.s32 %s26, 1
        // Predicated region
        $region13: #{tpu_custom_call.1} parent=11 // pred_check
          %p452 = pneg %p115
        $region14: #{tpu_custom_call.1} parent=11 // pred_check_branch
          %454 = sbr.rel (%p452) target = $region16
        $region15: #{tpu_custom_call.1} parent=11 // pred_region
          _
        $region16: #{tpu_custom_call.1} parent=11 // pred_fallthru
          _
        // Predicated region
        $region17: #{tpu_custom_call.1} parent=11 // pred_check
          %p455 = pneg %p136
        $region18: #{tpu_custom_call.1} parent=11 // pred_check_branch
          %457 = sbr.rel (%p455) target = $region20
        $region19: #{tpu_custom_call.1} parent=11 // pred_region
          _
        $region20: #{tpu_custom_call.1} parent=11 // pred_fallthru
          _
        // Predicated region
        $region21: #{tpu_custom_call.1} parent=11 // pred_check
          %p458 = pneg %p157
        $region22: #{tpu_custom_call.1} parent=11 // pred_check_branch
          %460 = sbr.rel (%p458) target = $region24
        $region23: #{tpu_custom_call.1} parent=11 // pred_region
          _
        $region24: #{tpu_custom_call.1} parent=11 // pred_fallthru
          _
        // Predicated region
        $region25: #{tpu_custom_call.1} parent=11 // pred_check
          %p461 = pneg %p178
        $region26: #{tpu_custom_call.1} parent=11 // pred_check_branch
          %463 = sbr.rel (%p461) target = $region28
        $region27: #{tpu_custom_call.1} parent=11 // pred_region
          _
        $region28: #{tpu_custom_call.1} parent=11 // pred_fallthru
          _
        // Predicated region
        $region29: #{tpu_custom_call.1} parent=11 // pred_check
          %p464 = pneg %p199
        $region30: #{tpu_custom_call.1} parent=11 // pred_check_branch
          %466 = sbr.rel (%p464) target = $region32
        $region31: #{tpu_custom_call.1} parent=11 // pred_region
          _
        $region32: #{tpu_custom_call.1} parent=11 // pred_fallthru
          _
        // Predicated region
        $region33: #{tpu_custom_call.1} parent=11 // pred_check
          %p467 = pneg %p220
        $region34: #{tpu_custom_call.1} parent=11 // pred_check_branch
          %469 = sbr.rel (%p467) target = $region36
        $region35: #{tpu_custom_call.1} parent=11 // pred_region
          _
        $region36: #{tpu_custom_call.1} parent=11 // pred_fallthru
          _
        // Predicated region
        $region37: #{tpu_custom_call.1} parent=11 // pred_check
          %p470 = pneg %p241
        $region38: #{tpu_custom_call.1} parent=11 // pred_check_branch
          %472 = sbr.rel (%p470) target = $region40
        $region39: #{tpu_custom_call.1} parent=11 // pred_region
          _
        $region40: #{tpu_custom_call.1} parent=11 // pred_fallthru
          _
        // Predicated region
        $region41: #{tpu_custom_call.1} parent=11 // pred_check
          %p473 = pneg %p262
        $region42: #{tpu_custom_call.1} parent=11 // pred_check_branch
          %475 = sbr.rel (%p473) target = $region44
        $region43: #{tpu_custom_call.1} parent=11 // pred_region
          _
        $region44: #{tpu_custom_call.1} parent=11 // pred_fallthru
          _
        // Predicated region
        $region45: #{tpu_custom_call.1} parent=11 // pred_check
          %p476 = pneg %p283
        $region46: #{tpu_custom_call.1} parent=11 // pred_check_branch
          %478 = sbr.rel (%p476) target = $region48
        $region47: #{tpu_custom_call.1} parent=11 // pred_region
          _
        $region48: #{tpu_custom_call.1} parent=11 // pred_fallthru
          _
        // Predicated region
        $region49: #{tpu_custom_call.1} parent=11 // pred_check
          %p479 = pneg %p304
        $region50: #{tpu_custom_call.1} parent=11 // pred_check_branch
          %481 = sbr.rel (%p479) target = $region52
        $region51: #{tpu_custom_call.1} parent=11 // pred_region
          _
        $region52: #{tpu_custom_call.1} parent=11 // pred_fallthru
          _
        // Predicated region
        $region53: #{tpu_custom_call.1} parent=11 // pred_check
          %p482 = pneg %p325
        $region54: #{tpu_custom_call.1} parent=11 // pred_check_branch
          %484 = sbr.rel (%p482) target = $region56
        $region55: #{tpu_custom_call.1} parent=11 // pred_region
          _
        $region56: #{tpu_custom_call.1} parent=11 // pred_fallthru
          _
        // Predicated region
        $region57: #{tpu_custom_call.1} parent=11 // pred_check
          %p485 = pneg %p346
        $region58: #{tpu_custom_call.1} parent=11 // pred_check_branch
          %487 = sbr.rel (%p485) target = $region60
        $region59: #{tpu_custom_call.1} parent=11 // pred_region
          _
        $region60: #{tpu_custom_call.1} parent=11 // pred_fallthru
          _
        // Predicated region
        $region61: #{tpu_custom_call.1} parent=11 // pred_check
          %p488 = pneg %p367
        $region62: #{tpu_custom_call.1} parent=11 // pred_check_branch
          %490 = sbr.rel (%p488) target = $region64
        $region63: #{tpu_custom_call.1} parent=11 // pred_region
          _
        $region64: #{tpu_custom_call.1} parent=11 // pred_fallthru
          _
        // Predicated region
        $region65: #{tpu_custom_call.1} parent=11 // pred_check
          %p491 = pneg %p388
        $region66: #{tpu_custom_call.1} parent=11 // pred_check_branch
          %493 = sbr.rel (%p491) target = $region68
        $region67: #{tpu_custom_call.1} parent=11 // pred_region
          _
        $region68: #{tpu_custom_call.1} parent=11 // pred_fallthru
          _
        // Predicated region
        $region69: #{tpu_custom_call.1} parent=11 // pred_check
          %p494 = pneg %p409
        $region70: #{tpu_custom_call.1} parent=11 // pred_check_branch
          %496 = sbr.rel (%p494) target = $region72
        $region71: #{tpu_custom_call.1} parent=11 // pred_region
          _
        $region72: #{tpu_custom_call.1} parent=11 // pred_fallthru
          _
      $region12: #{tpu_custom_call.1} parent=5 // pred_fallthru
        _
      %p497 = scmp.lt.s32.totalorder %s26, 2
      // Predicated region
      $region73: #{tpu_custom_call.1} parent=5 // pred_check
        %p498 = pneg %p497
      $region74: #{tpu_custom_call.1} parent=5 // pred_check_branch
        %500 = sbr.rel (%p498) target = $region76
      $region75: #{tpu_custom_call.1} parent=5 // pred_region
        // Predicated region
        $region77: #{tpu_custom_call.1} parent=75 // pred_check
          %p501 = pneg %p60
        $region78: #{tpu_custom_call.1} parent=75 // pred_check_branch
          %503 = sbr.rel (%p501) target = $region80
        $region79: #{tpu_custom_call.1} parent=75 // pred_region
          %s504 = smul.u32 8, %s34
          %p505 = scmp.lt.s32.totalorder %s33, 1
          %s506 = scalar_select %p505, %s33, 1
          %p507 = scmp.lt.s32.totalorder %s504, 7
          %s508 = scalar_select %p507, %s504, 7
          %s509 = smul.addr %s506, 8
          %s510 = sadd.s32 %s508, %s509
          %s511 = smul.addr %s510, 8
          %s512 = scalar_lea.vmem %s0, %s511
          %s513 = smul.u32 8, %s34
        $region80: #{tpu_custom_call.1} parent=75 // pred_fallthru
          _
        // Predicated region
        $region81: #{tpu_custom_call.1} parent=75 // pred_check
          %p514 = pneg %p88
        $region82: #{tpu_custom_call.1} parent=75 // pred_check_branch
          %516 = sbr.rel (%p514) target = $region84
        $region83: #{tpu_custom_call.1} parent=75 // pred_region
          %s517 = smul.u32 8, %s34
          %p518 = scmp.lt.s32.totalorder %s33, 1
          %s519 = scalar_select %p518, %s33, 1
          %p520 = scmp.lt.s32.totalorder %s517, 7
          %s521 = scalar_select %p520, %s517, 7
          %s522 = smul.addr %s519, 8
          %s523 = sadd.s32 %s521, %s522
          %s524 = smul.addr %s523, 8
          %s525 = scalar_lea.vmem %s1, %s524
          %s526 = smul.u32 8, %s34
        $region84: #{tpu_custom_call.1} parent=75 // pred_fallthru
          _
      $region76: #{tpu_custom_call.1} parent=5 // pred_fallthru
        _
      %p527 = scmp.le.s32.totalorder 1, %s26
      %p528 = scmp.lt.s32.totalorder %s26, 3
      %p529 = pnand %p527, %p528
      %p530 = pneg %p529
      // Predicated region
      $region85: #{tpu_custom_call.1} parent=5 // pred_check
        _
      $region86: #{tpu_custom_call.1} parent=5 // pred_check_branch
        %532 = sbr.rel (%p529) target = $region88
      $region87: #{tpu_custom_call.1} parent=5 // pred_region
        %s533 = ssub.s32 %s26, 1
        %s534 = smul.u32 8, %s36
        %p535 = scmp.lt.s32.totalorder %s35, 1
        %s536 = scalar_select %p535, %s35, 1
        %p537 = scmp.lt.s32.totalorder %s534, 7
        %s538 = scalar_select %p537, %s534, 7
        %s539 = smul.addr %s536, 8
        %s540 = sadd.s32 %s538, %s539
        %s541 = smul.addr %s540, 8
        %s542 = scalar_lea.vmem %s0, %s541
        %p543 = pneg %p66
        %p544 = pneg %p63
        %s545 = smul.u32 8, %s36
        %p546 = scmp.lt.s32.totalorder %s35, 1
        %s547 = scalar_select %p546, %s35, 1
        %p548 = scmp.lt.s32.totalorder %s545, 7
        %s549 = scalar_select %p548, %s545, 7
        %s550 = smul.addr %s547, 8
        %s551 = sadd.s32 %s549, %s550
        %s552 = smul.addr %s551, 8
        %s553 = scalar_lea.vmem %s1, %s552
        %p554 = pneg %p94
        %p555 = pneg %p91
        %p556 = pneg %p115
        %p557 = pneg %p112
        %p558 = pneg %p136
        %p559 = pneg %p133
        %p560 = pneg %p157
        %p561 = pneg %p154
        %p562 = pneg %p178
        %p563 = pneg %p175
        %p564 = pneg %p199
        %p565 = pneg %p196
        %p566 = pneg %p220
        %p567 = pneg %p217
        %p568 = pneg %p241
        %p569 = pneg %p238
        %p570 = pneg %p262
        %p571 = pneg %p259
        %p572 = pneg %p283
        %p573 = pneg %p280
        %p574 = pneg %p304
        %p575 = pneg %p301
        %p576 = pneg %p325
        %p577 = pneg %p322
        %p578 = pneg %p346
        %p579 = pneg %p343
        %p580 = pneg %p367
        %p581 = pneg %p364
        %p582 = pneg %p388
        %p583 = pneg %p385
        %p584 = pneg %p409
        %p585 = pneg %p406
        %p586 = pneg %p437
        %p587 = pneg %p434
        %s588 = sand.u32 %s424, 1
        %s589 = scalar_lea.sflag [#allocation3], %s588
        %s590 = sand.u32 %s424, 1
        %s591 = smul.addr %s590, 64
        %s592 = scalar_lea.vmem [#allocation2], %s591
        %s593 = smul.u32 8, %s36
        %p594 = scmp.lt.s32.totalorder %s35, 1
        %s595 = scalar_select %p594, %s35, 1
        %p596 = scmp.lt.s32.totalorder %s593, 7
        %s597 = scalar_select %p596, %s593, 7
        %s598 = smul.addr %s595, 8
        %s599 = sadd.s32 %s597, %s598
        %s600 = smul.addr %s599, 8
        %s601 = scalar_lea.vmem %s0, %s600
        %s602 = smul.u32 8, %s36
        %s603 = smul.u32 8, %s36
        %p604 = scmp.lt.s32.totalorder %s35, 1
        %s605 = scalar_select %p604, %s35, 1
        %p606 = scmp.lt.s32.totalorder %s603, 7
        %s607 = scalar_select %p606, %s603, 7
        %s608 = smul.addr %s605, 8
        %s609 = sadd.s32 %s607, %s608
        %s610 = smul.addr %s609, 8
        %s611 = scalar_lea.vmem %s1, %s610
        %s612 = smul.u32 8, %s36
        %s613 = smul.u32 8, %s36
        %v614 = vld [vmem:[%s601] sm:$0xff]
        %v615 = vld [vmem:[%s601 + $0x8] sm:$0xff]
        %v616 = vld [vmem:[%s601 + $0x10] sm:$0xff]
        %v617 = vld [vmem:[%s601 + $0x18] sm:$0xff]
        %v618 = vld [vmem:[%s601 + $0x20] sm:$0xff]
        %v619 = vld [vmem:[%s601 + $0x28] sm:$0xff]
        %v620 = vld [vmem:[%s601 + $0x30] sm:$0xff]
        %v621 = vld [vmem:[%s601 + $0x38] sm:$0xff]
        %v622 = vld [vmem:[%s611] sm:$0xff]
        %v623 = vld [vmem:[%s611 + $0x8] sm:$0xff]
        %v624 = vld [vmem:[%s611 + $0x10] sm:$0xff]
        %v625 = vld [vmem:[%s611 + $0x18] sm:$0xff]
        %v626 = vld [vmem:[%s611 + $0x20] sm:$0xff]
        %v627 = vld [vmem:[%s611 + $0x28] sm:$0xff]
        %v628 = vld [vmem:[%s611 + $0x30] sm:$0xff]
        %v629 = vld [vmem:[%s611 + $0x38] sm:$0xff]
        %v630 = vld [vmem:[%s2] sm:$0xff]
        %v631 = vld [vmem:[%s2 + $0x8] sm:$0xff]
        %v632 = vld [vmem:[%s2 + $0x10] sm:$0x3]
        %v633 = vld [vmem:[%s3] sm:$0x1]
        %v635 = vlaneseq
        %v636 = vshrl.u32 %v635, 7
        %v637 = vsub.s32 0, %v636
        %v638 = vrot.slane %v633, %v637
        %vm640 = vcmask 146432
        %v642 = vsel %vm640, %v622, 0
        %v645 = vsel %vm640, %v623, 0
        %v648 = vsel %vm640, %v624, 0
        %v651 = vsel %vm640, %v625, 0
        %v654 = vsel %vm640, %v626, 0
        %v657 = vsel %vm640, %v627, 0
        %v660 = vsel %vm640, %v628, 0
        %v663 = vsel %vm640, %v629, 0
        %vm665 = vcmask 1041408
        %v667 = vsel %vm665, %v632, 0
        %669 = vmatprep.subr.mxu0 0.0
        %670 = vmatpush1.msra.mxu0 %v630
        %671 = vmatprep.subr.mxu0 0.0
        %672 = vmatpush1.msra.mxu0 %v631
        %673 = vmatprep.subr.mxu0 0.0
        %674 = vmatpush1.msra.mxu0 %v667
        %675 = vmatprep.subr.mxu0 0.0
        %676 = vmatpush1.msra.mxu0 0.0
        %677 = vmatprep.subr.mxu0 0.0
        %678 = vmatpush1.msra.mxu0 0.0
        %679 = vmatprep.subr.mxu0 0.0
        %680 = vmatpush1.msra.mxu0 0.0
        %681 = vmatprep.subr.mxu0 0.0
        %682 = vmatpush1.msra.mxu0 0.0
        %683 = vmatprep.subr.mxu0 0.0
        %684 = vmatpush1.msra.mxu0 0.0
        %685 = vmatprep.subr.mxu0 0.0
        %686 = vmatpush1.msra.mxu0 0.0
        %687 = vmatprep.subr.mxu0 0.0
        %688 = vmatpush1.msra.mxu0 0.0
        %689 = vmatprep.subr.mxu0 0.0
        %690 = vmatpush1.msra.mxu0 0.0
        %691 = vmatprep.subr.mxu0 0.0
        %692 = vmatpush1.msra.mxu0 0.0
        %693 = vmatprep.subr.mxu0 0.0
        %694 = vmatpush1.msra.mxu0 0.0
        %695 = vmatprep.subr.mxu0 0.0
        %696 = vmatpush1.msra.mxu0 0.0
        %697 = vmatprep.subr.mxu0 0.0
        %698 = vmatpush1.msra.mxu0 0.0
        %699 = vmatprep.subr.mxu0 0.0
        %700 = vmatpush1.msra.mxu0 0.0
        %701 = vmatprep.subr.mxu0 0.0
        %702 = vmatpush1.msra.mxu0 0.0
        %703 = vmatprep.subr.mxu0 0.0
        %704 = vmatpush1.msra.mxu0 0.0
        %705 = vmatprep.subr.mxu0 0.0
        %706 = vmatpush1.msra.mxu0 0.0
        %707 = vmatprep.subr.mxu0 0.0
        %708 = vmatpush1.msra.mxu0 0.0
        %709 = vmatprep.subr.mxu0 0.0
        %710 = vmatpush1.msra.mxu0 0.0
        %711 = vmatprep.subr.mxu0 0.0
        %712 = vmatpush1.msra.mxu0 0.0
        %713 = vmatprep.subr.mxu0 0.0
        %714 = vmatpush1.msra.mxu0 0.0
        %715 = vmatprep.subr.mxu0 0.0
        %716 = vmatpush1.msra.mxu0 0.0
        %717 = vmatprep.subr.mxu0 0.0
        %718 = vmatpush1.msra.mxu0 0.0
        %719 = vmatprep.subr.mxu0 0.0
        %720 = vmatpush1.msra.mxu0 0.0
        %721 = vmatprep.subr.mxu0 0.0
        %722 = vmatpush1.msra.mxu0 0.0
        %723 = vmatprep.subr.mxu0 0.0
        %724 = vmatpush1.msra.mxu0 0.0
        %725 = vmatprep.subr.mxu0 0.0
        %726 = vmatpush1.msra.mxu0 0.0
        %727 = vmatprep.subr.mxu0 0.0
        %728 = vmatpush1.msra.mxu0 0.0
        %729 = vmatprep.subr.mxu0 0.0
        %730 = vmatpush1.msra.mxu0 0.0
        %731 = vmatprep.subr.mxu0 0.0
        %732 = vmatpush1.msra.mxu0 0.0
        %733 = vmatprep.mubr.f32.mxu0 0.0
        %734 = vmatmul.mubr.f32.gmra.mrb[0].mxu0 %v642
        %v735 = vpop.f32.mrb[0].mxu0
        %v736 = vadd.f32 %v638, %v735
        %v737 = vpop.f32.mrb[0].mxu0
        %738 = vmatprep.mubr.f32.mxu0 0.0
        %739 = vmatmul.mubr.f32.gmra.mrb[0].mxu0 %v645
        %v740 = vpop.f32.mrb[0].mxu0
        %v741 = vadd.f32 %v638, %v740
        %v742 = vpop.f32.mrb[0].mxu0
        %743 = vmatprep.mubr.f32.mxu0 0.0
        %744 = vmatmul.mubr.f32.gmra.mrb[0].mxu0 %v648
        %v745 = vpop.f32.mrb[0].mxu0
        %v746 = vadd.f32 %v638, %v745
        %v747 = vpop.f32.mrb[0].mxu0
        %748 = vmatprep.mubr.f32.mxu0 0.0
        %749 = vmatmul.mubr.f32.gmra.mrb[0].mxu0 %v651
        %v750 = vpop.f32.mrb[0].mxu0
        %v751 = vadd.f32 %v638, %v750
        %v752 = vpop.f32.mrb[0].mxu0
        %753 = vmatprep.mubr.f32.mxu0 0.0
        %754 = vmatmul.mubr.f32.gmra.mrb[0].mxu0 %v654
        %v755 = vpop.f32.mrb[0].mxu0
        %v756 = vadd.f32 %v638, %v755
        %v757 = vpop.f32.mrb[0].mxu0
        %758 = vmatprep.mubr.f32.mxu0 0.0
        %759 = vmatmul.mubr.f32.gmra.mrb[0].mxu0 %v657
        %v760 = vpop.f32.mrb[0].mxu0
        %v761 = vadd.f32 %v638, %v760
        %v762 = vpop.f32.mrb[0].mxu0
        %763 = vmatprep.mubr.f32.mxu0 0.0
        %764 = vmatmul.mubr.f32.gmra.mrb[0].mxu0 %v660
        %v765 = vpop.f32.mrb[0].mxu0
        %v766 = vadd.f32 %v638, %v765
        %v767 = vpop.f32.mrb[0].mxu0
        %768 = vmatprep.mubr.f32.mxu0 0.0
        %769 = vmatmul.mubr.f32.gmra.mrb[0].mxu0 %v663
        %v770 = vpop.f32.mrb[0].mxu0
        %v771 = vadd.f32 %v638, %v770
        %v772 = vpop.f32.mrb[0].mxu0
        %773 = vdwg.mxu0
        %v774 = vmul.f32 %v736, 0.5
        %v775 = vmul.f32 %v741, 0.5
        %v776 = vmul.f32 %v746, 0.5
        %v777 = vmul.f32 %v751, 0.5
        %v778 = vmul.f32 %v756, 0.5
        %v779 = vmul.f32 %v761, 0.5
        %v780 = vmul.f32 %v766, 0.5
        %v781 = vmul.f32 %v771, 0.5
        %v782 = vmul.f32 %v736, 0.044715
        %v783 = vmul.f32 %v741, 0.044715
        %v784 = vmul.f32 %v746, 0.044715
        %v785 = vmul.f32 %v751, 0.044715
        %v786 = vmul.f32 %v756, 0.044715
        %v787 = vmul.f32 %v761, 0.044715
        %v788 = vmul.f32 %v766, 0.044715
        %v789 = vmul.f32 %v771, 0.044715
        %v790 = vmul.f32 %v782, %v736
        %v791 = vmul.f32 %v783, %v741
        %v792 = vmul.f32 %v784, %v746
        %v793 = vmul.f32 %v785, %v751
        %v794 = vmul.f32 %v786, %v756
        %v795 = vmul.f32 %v787, %v761
        %v796 = vmul.f32 %v788, %v766
        %v797 = vmul.f32 %v789, %v771
        %v798 = vmul.f32 %v790, %v736
        %v799 = vmul.f32 %v791, %v741
        %v800 = vmul.f32 %v792, %v746
        %v801 = vmul.f32 %v793, %v751
        %v802 = vmul.f32 %v794, %v756
        %v803 = vmul.f32 %v795, %v761
        %v804 = vmul.f32 %v796, %v766
        %v805 = vmul.f32 %v797, %v771
        %v806 = vadd.f32 %v736, %v798
        %v807 = vadd.f32 %v741, %v799
        %v808 = vadd.f32 %v746, %v800
        %v809 = vadd.f32 %v751, %v801
        %v810 = vadd.f32 %v756, %v802
        %v811 = vadd.f32 %v761, %v803
        %v812 = vadd.f32 %v766, %v804
        %v813 = vadd.f32 %v771, %v805
        %v814 = vmul.f32 %v806, 0.7978846
        %v815 = vmul.f32 %v807, 0.7978846
        %v816 = vmul.f32 %v808, 0.7978846
        %v817 = vmul.f32 %v809, 0.7978846
        %v818 = vmul.f32 %v810, 0.7978846
        %v819 = vmul.f32 %v811, 0.7978846
        %v820 = vmul.f32 %v812, 0.7978846
        %v821 = vmul.f32 %v813, 0.7978846
        %v822 = vtanh.pop %v814
        %v823 = vtanh.pop %v815
        %v824 = vtanh.pop %v816
        %v825 = vtanh.pop %v817
        %v826 = vtanh.pop %v818
        %v827 = vtanh.pop %v819
        %v828 = vtanh.pop %v820
        %v829 = vtanh.pop %v821
        %v830 = vadd.f32 %v822, 1.0
        %v831 = vadd.f32 %v823, 1.0
        %v832 = vadd.f32 %v824, 1.0
        %v833 = vadd.f32 %v825, 1.0
        %v834 = vadd.f32 %v826, 1.0
        %v835 = vadd.f32 %v827, 1.0
        %v836 = vadd.f32 %v828, 1.0
        %v837 = vadd.f32 %v829, 1.0
        %v838 = vmul.f32 %v774, %v830
        %v839 = vmul.f32 %v775, %v831
        %v840 = vmul.f32 %v776, %v832
        %v841 = vmul.f32 %v777, %v833
        %v842 = vmul.f32 %v778, %v834
        %v843 = vmul.f32 %v779, %v835
        %v844 = vmul.f32 %v780, %v836
        %v845 = vmul.f32 %v781, %v837
        %v846 = vld [vmem:[%s4] sm:$0xff]
        %v847 = vld [vmem:[%s4 + $0x8] sm:$0xff]
        %v848 = vld [vmem:[%s4 + $0x10] sm:$0xff]
        %v849 = vld [vmem:[%s4 + $0x18] sm:$0xff]
        %v850 = vld [vmem:[%s4 + $0x20] sm:$0xff]
        %v851 = vld [vmem:[%s4 + $0x28] sm:$0xff]
        %v852 = vld [vmem:[%s4 + $0x30] sm:$0xff]
        %v853 = vld [vmem:[%s4 + $0x38] sm:$0xff]
        %v854 = vld [vmem:[%s5] sm:$0x1]
        %v856 = vlaneseq
        %v857 = vshrl.u32 %v856, 7
        %v858 = vsub.s32 0, %v857
        %v859 = vrot.slane %v854, %v858
        %vm861 = vcmask 523264
        %v863 = vsel %vm861, %v838, 0
        %v866 = vsel %vm861, %v839, 0
        %v869 = vsel %vm861, %v840, 0
        %v872 = vsel %vm861, %v841, 0
        %v875 = vsel %vm861, %v842, 0
        %v878 = vsel %vm861, %v843, 0
        %v881 = vsel %vm861, %v844, 0
        %v884 = vsel %vm861, %v845, 0
        %886 = vmatprep.subr.mxu0 0.0
        %887 = vmatpush1.msra.mxu0 %v846
        %888 = vmatprep.subr.mxu0 0.0
        %889 = vmatpush1.msra.mxu0 %v847
        %890 = vmatprep.subr.mxu0 0.0
        %891 = vmatpush1.msra.mxu0 %v848
        %892 = vmatprep.subr.mxu0 0.0
        %893 = vmatpush1.msra.mxu0 %v849
        %894 = vmatprep.subr.mxu0 0.0
        %895 = vmatpush1.msra.mxu0 %v850
        %896 = vmatprep.subr.mxu0 0.0
        %897 = vmatpush1.msra.mxu0 %v851
        %898 = vmatprep.subr.mxu0 0.0
        %899 = vmatpush1.msra.mxu0 %v852
        %900 = vmatprep.subr.mxu0 0.0
        %901 = vmatpush1.msra.mxu0 %v853
        %902 = vmatprep.subr.mxu0 0.0
        %903 = vmatpush1.msra.mxu0 0.0
        %904 = vmatprep.subr.mxu0 0.0
        %905 = vmatpush1.msra.mxu0 0.0
        %906 = vmatprep.subr.mxu0 0.0
        %907 = vmatpush1.msra.mxu0 0.0
        %908 = vmatprep.subr.mxu0 0.0
        %909 = vmatpush1.msra.mxu0 0.0
        %910 = vmatprep.subr.mxu0 0.0
        %911 = vmatpush1.msra.mxu0 0.0
        %912 = vmatprep.subr.mxu0 0.0
        %913 = vmatpush1.msra.mxu0 0.0
        %914 = vmatprep.subr.mxu0 0.0
        %915 = vmatpush1.msra.mxu0 0.0
        %916 = vmatprep.subr.mxu0 0.0
        %917 = vmatpush1.msra.mxu0 0.0
        %918 = vmatprep.subr.mxu0 0.0
        %919 = vmatpush1.msra.mxu0 0.0
        %920 = vmatprep.subr.mxu0 0.0
        %921 = vmatpush1.msra.mxu0 0.0
        %922 = vmatprep.subr.mxu0 0.0
        %923 = vmatpush1.msra.mxu0 0.0
        %924 = vmatprep.subr.mxu0 0.0
        %925 = vmatpush1.msra.mxu0 0.0
        %926 = vmatprep.subr.mxu0 0.0
        %927 = vmatpush1.msra.mxu0 0.0
        %928 = vmatprep.subr.mxu0 0.0
        %929 = vmatpush1.msra.mxu0 0.0
        %930 = vmatprep.subr.mxu0 0.0
        %931 = vmatpush1.msra.mxu0 0.0
        %932 = vmatprep.subr.mxu0 0.0
        %933 = vmatpush1.msra.mxu0 0.0
        %934 = vmatprep.subr.mxu0 0.0
        %935 = vmatpush1.msra.mxu0 0.0
        %936 = vmatprep.subr.mxu0 0.0
        %937 = vmatpush1.msra.mxu0 0.0
        %938 = vmatprep.subr.mxu0 0.0
        %939 = vmatpush1.msra.mxu0 0.0
        %940 = vmatprep.subr.mxu0 0.0
        %941 = vmatpush1.msra.mxu0 0.0
        %942 = vmatprep.subr.mxu0 0.0
        %943 = vmatpush1.msra.mxu0 0.0
        %944 = vmatprep.subr.mxu0 0.0
        %945 = vmatpush1.msra.mxu0 0.0
        %946 = vmatprep.subr.mxu0 0.0
        %947 = vmatpush1.msra.mxu0 0.0
        %948 = vmatprep.subr.mxu0 0.0
        %949 = vmatpush1.msra.mxu0 0.0
        %950 = vmatprep.mubr.f32.mxu0 0.0
        %951 = vmatmul.mubr.f32.gmra.mrb[0].mxu0 %v863
        %v952 = vpop.f32.mrb[0].mxu0
        %v953 = vadd.f32 %v859, %v952
        %v954 = vpop.f32.mrb[0].mxu0
        %955 = vmatprep.mubr.f32.mxu0 0.0
        %956 = vmatmul.mubr.f32.gmra.mrb[0].mxu0 %v866
        %v957 = vpop.f32.mrb[0].mxu0
        %v958 = vadd.f32 %v859, %v957
        %v959 = vpop.f32.mrb[0].mxu0
        %960 = vmatprep.mubr.f32.mxu0 0.0
        %961 = vmatmul.mubr.f32.gmra.mrb[0].mxu0 %v869
        %v962 = vpop.f32.mrb[0].mxu0
        %v963 = vadd.f32 %v859, %v962
        %v964 = vpop.f32.mrb[0].mxu0
        %965 = vmatprep.mubr.f32.mxu0 0.0
        %966 = vmatmul.mubr.f32.gmra.mrb[0].mxu0 %v872
        %v967 = vpop.f32.mrb[0].mxu0
        %v968 = vadd.f32 %v859, %v967
        %v969 = vpop.f32.mrb[0].mxu0
        %970 = vmatprep.mubr.f32.mxu0 0.0
        %971 = vmatmul.mubr.f32.gmra.mrb[0].mxu0 %v875
        %v972 = vpop.f32.mrb[0].mxu0
        %v973 = vadd.f32 %v859, %v972
        %v974 = vpop.f32.mrb[0].mxu0
        %975 = vmatprep.mubr.f32.mxu0 0.0
        %976 = vmatmul.mubr.f32.gmra.mrb[0].mxu0 %v878
        %v977 = vpop.f32.mrb[0].mxu0
        %v978 = vadd.f32 %v859, %v977
        %v979 = vpop.f32.mrb[0].mxu0
        %980 = vmatprep.mubr.f32.mxu0 0.0
        %981 = vmatmul.mubr.f32.gmra.mrb[0].mxu0 %v881
        %v982 = vpop.f32.mrb[0].mxu0
        %v983 = vadd.f32 %v859, %v982
        %v984 = vpop.f32.mrb[0].mxu0
        %985 = vmatprep.mubr.f32.mxu0 0.0
        %986 = vmatmul.mubr.f32.gmra.mrb[0].mxu0 %v884
        %v987 = vpop.f32.mrb[0].mxu0
        %v988 = vadd.f32 %v859, %v987
        %v989 = vpop.f32.mrb[0].mxu0
        %990 = vdwg.mxu0
        %v991 = vld [vmem:[%s6] sm:$0x1]
        %993 = vset.pattern.permute.xlu0 0
        %994 = vperm.xlu0 %993, %v614
        %v995 = vpop.permute.xlu0 %994
        %998 = vset.pattern.permute.xlu0 0
        %999 = vperm.xlu0 %998, %v615
        %v1000 = vpop.permute.xlu0 %999
        %1003 = vset.pattern.permute.xlu0 0
        %1004 = vperm.xlu0 %1003, %v616
        %v1005 = vpop.permute.xlu0 %1004
        %1008 = vset.pattern.permute.xlu0 0
        %1009 = vperm.xlu0 %1008, %v617
        %v1010 = vpop.permute.xlu0 %1009
        %1013 = vset.pattern.permute.xlu0 0
        %1014 = vperm.xlu0 %1013, %v618
        %v1015 = vpop.permute.xlu0 %1014
        %1018 = vset.pattern.permute.xlu0 0
        %1019 = vperm.xlu0 %1018, %v619
        %v1020 = vpop.permute.xlu0 %1019
        %1023 = vset.pattern.permute.xlu0 0
        %1024 = vperm.xlu0 %1023, %v620
        %v1025 = vpop.permute.xlu0 %1024
        %1028 = vset.pattern.permute.xlu0 0
        %1029 = vperm.xlu0 %1028, %v621
        %v1030 = vpop.permute.xlu0 %1029
        %v1033 = vlaneseq
        %v1034 = vshrl.u32 %v1033, 7
        %v1035 = vsub.s32 0, %v1034
        %v1036 = vrot.slane %v991, %v1035
        %v1038 = vmul.f32 %v995, %v1036
        %v1039 = vmul.f32 %v1000, %v1036
        %v1040 = vmul.f32 %v1005, %v1036
        %v1041 = vmul.f32 %v1010, %v1036
        %v1042 = vmul.f32 %v1015, %v1036
        %v1043 = vmul.f32 %v1020, %v1036
        %v1044 = vmul.f32 %v1025, %v1036
        %v1045 = vmul.f32 %v1030, %v1036
        %v1046 = vld [vmem:[%s7] sm:$0x1]
        %v1048 = vlaneseq
        %v1049 = vshrl.u32 %v1048, 7
        %v1050 = vsub.s32 0, %v1049
        %v1051 = vrot.slane %v1046, %v1050
        %v1053 = vadd.f32 %v1038, %v1051
        %v1054 = vadd.f32 %v1039, %v1051
        %v1055 = vadd.f32 %v1040, %v1051
        %v1056 = vadd.f32 %v1041, %v1051
        %v1057 = vadd.f32 %v1042, %v1051
        %v1058 = vadd.f32 %v1043, %v1051
        %v1059 = vadd.f32 %v1044, %v1051
        %v1060 = vadd.f32 %v1045, %v1051
        %1061 = vset.pattern.permute.xlu0 3
        %1062 = vperm.xlu0 %1061, %v614
        %v1063 = vpop.permute.xlu0 %1062
        %1065 = vset.pattern.permute.xlu0 3
        %1066 = vperm.xlu0 %1065, %v615
        %v1067 = vpop.permute.xlu0 %1066
        %1069 = vset.pattern.permute.xlu0 3
        %1070 = vperm.xlu0 %1069, %v616
        %v1071 = vpop.permute.xlu0 %1070
        %1073 = vset.pattern.permute.xlu0 3
        %1074 = vperm.xlu0 %1073, %v617
        %v1075 = vpop.permute.xlu0 %1074
        %1077 = vset.pattern.permute.xlu0 3
        %1078 = vperm.xlu0 %1077, %v618
        %v1079 = vpop.permute.xlu0 %1078
        %1081 = vset.pattern.permute.xlu0 3
        %1082 = vperm.xlu0 %1081, %v619
        %v1083 = vpop.permute.xlu0 %1082
        %1085 = vset.pattern.permute.xlu0 3
        %1086 = vperm.xlu0 %1085, %v620
        %v1087 = vpop.permute.xlu0 %1086
        %1089 = vset.pattern.permute.xlu0 3
        %1090 = vperm.xlu0 %1089, %v621
        %v1091 = vpop.permute.xlu0 %1090
        %v1093 = vmul.f32 %v1053, %v1063
        %v1094 = vmul.f32 %v1054, %v1067
        %v1095 = vmul.f32 %v1055, %v1071
        %v1096 = vmul.f32 %v1056, %v1075
        %v1097 = vmul.f32 %v1057, %v1079
        %v1098 = vmul.f32 %v1058, %v1083
        %v1099 = vmul.f32 %v1059, %v1087
        %v1100 = vmul.f32 %v1060, %v1091
        %v1101 = vld [vmem:[%s8] sm:$0x1]
        %v1103 = vlaneseq
        %v1104 = vshrl.u32 %v1103, 7
        %v1105 = vsub.s32 0, %v1104
        %v1106 = vrot.slane %v1101, %v1105
        %v1108 = vmul.f32 %v995, %v1106
        %v1109 = vmul.f32 %v1000, %v1106
        %v1110 = vmul.f32 %v1005, %v1106
        %v1111 = vmul.f32 %v1010, %v1106
        %v1112 = vmul.f32 %v1015, %v1106
        %v1113 = vmul.f32 %v1020, %v1106
        %v1114 = vmul.f32 %v1025, %v1106
        %v1115 = vmul.f32 %v1030, %v1106
        %v1116 = vld [vmem:[%s9] sm:$0x1]
        %v1118 = vlaneseq
        %v1119 = vshrl.u32 %v1118, 7
        %v1120 = vsub.s32 0, %v1119
        %v1121 = vrot.slane %v1116, %v1120
        %v1123 = vadd.f32 %v1108, %v1121
        %v1124 = vadd.f32 %v1109, %v1121
        %v1125 = vadd.f32 %v1110, %v1121
        %v1126 = vadd.f32 %v1111, %v1121
        %v1127 = vadd.f32 %v1112, %v1121
        %v1128 = vadd.f32 %v1113, %v1121
        %v1129 = vadd.f32 %v1114, %v1121
        %v1130 = vadd.f32 %v1115, %v1121
        %v1131 = vsub.f32 1.0, %v614
        %v1132 = vsub.f32 1.0, %v615
        %v1133 = vsub.f32 1.0, %v616
        %v1134 = vsub.f32 1.0, %v617
        %v1135 = vsub.f32 1.0, %v618
        %v1136 = vsub.f32 1.0, %v619
        %v1137 = vsub.f32 1.0, %v620
        %v1138 = vsub.f32 1.0, %v621
        %1140 = vset.pattern.permute.xlu0 3
        %1141 = vperm.xlu0 %1140, %v1131
        %v1142 = vpop.permute.xlu0 %1141
        %1145 = vset.pattern.permute.xlu0 3
        %1146 = vperm.xlu0 %1145, %v1132
        %v1147 = vpop.permute.xlu0 %1146
        %1150 = vset.pattern.permute.xlu0 3
        %1151 = vperm.xlu0 %1150, %v1133
        %v1152 = vpop.permute.xlu0 %1151
        %1155 = vset.pattern.permute.xlu0 3
        %1156 = vperm.xlu0 %1155, %v1134
        %v1157 = vpop.permute.xlu0 %1156
        %1160 = vset.pattern.permute.xlu0 3
        %1161 = vperm.xlu0 %1160, %v1135
        %v1162 = vpop.permute.xlu0 %1161
        %1165 = vset.pattern.permute.xlu0 3
        %1166 = vperm.xlu0 %1165, %v1136
        %v1167 = vpop.permute.xlu0 %1166
        %1170 = vset.pattern.permute.xlu0 3
        %1171 = vperm.xlu0 %1170, %v1137
        %v1172 = vpop.permute.xlu0 %1171
        %1175 = vset.pattern.permute.xlu0 3
        %1176 = vperm.xlu0 %1175, %v1138
        %v1177 = vpop.permute.xlu0 %1176
        %v1179 = vmul.f32 %v1123, %v1142
        %v1180 = vmul.f32 %v1124, %v1147
        %v1181 = vmul.f32 %v1125, %v1152
        %v1182 = vmul.f32 %v1126, %v1157
        %v1183 = vmul.f32 %v1127, %v1162
        %v1184 = vmul.f32 %v1128, %v1167
        %v1185 = vmul.f32 %v1129, %v1172
        %v1186 = vmul.f32 %v1130, %v1177
        %v1187 = vadd.f32 %v1093, %v1179
        %v1188 = vadd.f32 %v1094, %v1180
        %v1189 = vadd.f32 %v1095, %v1181
        %v1190 = vadd.f32 %v1096, %v1182
        %v1191 = vadd.f32 %v1097, %v1183
        %v1192 = vadd.f32 %v1098, %v1184
        %v1193 = vadd.f32 %v1099, %v1185
        %v1194 = vadd.f32 %v1100, %v1186
        %v1195 = vld [vmem:[%s10] sm:$0xff]
        %v1196 = vld [vmem:[%s10 + $0x8] sm:$0xff]
        %v1197 = vld [vmem:[%s10 + $0x10] sm:$0xff]
        %v1198 = vld [vmem:[%s10 + $0x18] sm:$0xff]
        %v1199 = vld [vmem:[%s10 + $0x20] sm:$0xff]
        %v1200 = vld [vmem:[%s10 + $0x28] sm:$0xff]
        %v1201 = vld [vmem:[%s10 + $0x30] sm:$0xff]
        %v1202 = vld [vmem:[%s10 + $0x38] sm:$0xff]
        %vm1203 = vcmask 261120
        %v1205 = vsel %vm1203, %v1187, 0
        %v1208 = vsel %vm1203, %v1188, 0
        %v1211 = vsel %vm1203, %v1189, 0
        %v1214 = vsel %vm1203, %v1190, 0
        %v1217 = vsel %vm1203, %v1191, 0
        %v1220 = vsel %vm1203, %v1192, 0
        %v1223 = vsel %vm1203, %v1193, 0
        %v1226 = vsel %vm1203, %v1194, 0
        %1228 = vmatprep.subr.mxu0 0.0
        %1229 = vmatpush1.msra.mxu0 %v1199
        %1230 = vmatprep.subr.mxu0 0.0
        %1231 = vmatpush1.msra.mxu0 %v1200
        %1232 = vmatprep.subr.mxu0 0.0
        %1233 = vmatpush1.msra.mxu0 %v1201
        %1234 = vmatprep.subr.mxu0 0.0
        %1235 = vmatpush1.msra.mxu0 %v1202
        %1236 = vmatprep.subr.mxu0 0.0
        %1237 = vmatpush1.msra.mxu0 0.0
        %1238 = vmatprep.subr.mxu0 0.0
        %1239 = vmatpush1.msra.mxu0 0.0
        %1240 = vmatprep.subr.mxu0 0.0
        %1241 = vmatpush1.msra.mxu0 0.0
        %1242 = vmatprep.subr.mxu0 0.0
        %1243 = vmatpush1.msra.mxu0 0.0
        %1244 = vmatprep.subr.mxu0 0.0
        %1245 = vmatpush1.msra.mxu0 0.0
        %1246 = vmatprep.subr.mxu0 0.0
        %1247 = vmatpush1.msra.mxu0 0.0
        %1248 = vmatprep.subr.mxu0 0.0
        %1249 = vmatpush1.msra.mxu0 0.0
        %1250 = vmatprep.subr.mxu0 0.0
        %1251 = vmatpush1.msra.mxu0 0.0
        %1252 = vmatprep.subr.mxu0 0.0
        %1253 = vmatpush1.msra.mxu0 0.0
        %1254 = vmatprep.subr.mxu0 0.0
        %1255 = vmatpush1.msra.mxu0 0.0
        %1256 = vmatprep.subr.mxu0 0.0
        %1257 = vmatpush1.msra.mxu0 0.0
        %1258 = vmatprep.subr.mxu0 0.0
        %1259 = vmatpush1.msra.mxu0 0.0
        %1260 = vmatprep.subr.mxu0 0.0
        %1261 = vmatpush1.msra.mxu0 0.0
        %1262 = vmatprep.subr.mxu0 0.0
        %1263 = vmatpush1.msra.mxu0 0.0
        %1264 = vmatprep.subr.mxu0 0.0
        %1265 = vmatpush1.msra.mxu0 0.0
        %1266 = vmatprep.subr.mxu0 0.0
        %1267 = vmatpush1.msra.mxu0 0.0
        %1268 = vmatprep.subr.mxu0 0.0
        %1269 = vmatpush1.msra.mxu0 0.0
        %1270 = vmatprep.subr.mxu0 0.0
        %1271 = vmatpush1.msra.mxu0 0.0
        %1272 = vmatprep.subr.mxu0 0.0
        %1273 = vmatpush1.msra.mxu0 0.0
        %1274 = vmatprep.subr.mxu0 0.0
        %1275 = vmatpush1.msra.mxu0 0.0
        %1276 = vmatprep.subr.mxu0 0.0
        %1277 = vmatpush1.msra.mxu0 0.0
        %1278 = vmatprep.subr.mxu0 0.0
        %1279 = vmatpush1.msra.mxu0 0.0
        %1280 = vmatprep.subr.mxu0 0.0
        %1281 = vmatpush1.msra.mxu0 0.0
        %1282 = vmatprep.subr.mxu0 0.0
        %1283 = vmatpush1.msra.mxu0 0.0
        %1284 = vmatprep.subr.mxu0 0.0
        %1285 = vmatpush1.msra.mxu0 0.0
        %1286 = vmatprep.subr.mxu0 0.0
        %1287 = vmatpush1.msra.mxu0 0.0
        %1288 = vmatprep.subr.mxu0 0.0
        %1289 = vmatpush1.msra.mxu0 0.0
        %1290 = vmatprep.subr.mxu0 0.0
        %1291 = vmatpush1.msra.mxu0 0.0
        %1292 = vmatprep.mubr.f32.mxu0 0.0
        %1293 = vmatmul.mubr.f32.gmra.mrb[0].mxu0 %v1205
        %v1294 = vpop.f32.mrb[0].mxu0
        %v1295 = vadd.f32 0.0, %v1294
        %v1296 = vpop.f32.mrb[0].mxu0
        %1297 = vmatprep.mubr.f32.mxu0 0.0
        %1298 = vmatmul.mubr.f32.gmra.mrb[0].mxu0 %v1208
        %v1299 = vpop.f32.mrb[0].mxu0
        %v1300 = vadd.f32 0.0, %v1299
        %v1301 = vpop.f32.mrb[0].mxu0
        %1302 = vmatprep.mubr.f32.mxu0 0.0
        %1303 = vmatmul.mubr.f32.gmra.mrb[0].mxu0 %v1211
        %v1304 = vpop.f32.mrb[0].mxu0
        %v1305 = vadd.f32 0.0, %v1304
        %v1306 = vpop.f32.mrb[0].mxu0
        %1307 = vmatprep.mubr.f32.mxu0 0.0
        %1308 = vmatmul.mubr.f32.gmra.mrb[0].mxu0 %v1214
        %v1309 = vpop.f32.mrb[0].mxu0
        %v1310 = vadd.f32 0.0, %v1309
        %v1311 = vpop.f32.mrb[0].mxu0
        %1312 = vmatprep.mubr.f32.mxu0 0.0
        %1313 = vmatmul.mubr.f32.gmra.mrb[0].mxu0 %v1217
        %v1314 = vpop.f32.mrb[0].mxu0
        %v1315 = vadd.f32 0.0, %v1314
        %v1316 = vpop.f32.mrb[0].mxu0
        %1317 = vmatprep.mubr.f32.mxu0 0.0
        %1318 = vmatmul.mubr.f32.gmra.mrb[0].mxu0 %v1220
        %v1319 = vpop.f32.mrb[0].mxu0
        %v1320 = vadd.f32 0.0, %v1319
        %v1321 = vpop.f32.mrb[0].mxu0
        %1322 = vmatprep.mubr.f32.mxu0 0.0
        %1323 = vmatmul.mubr.f32.gmra.mrb[0].mxu0 %v1223
        %v1324 = vpop.f32.mrb[0].mxu0
        %v1325 = vadd.f32 0.0, %v1324
        %v1326 = vpop.f32.mrb[0].mxu0
        %1327 = vmatprep.mubr.f32.mxu0 0.0
        %1328 = vmatmul.mubr.f32.gmra.mrb[0].mxu0 %v1226
        %v1329 = vpop.f32.mrb[0].mxu0
        %v1330 = vadd.f32 0.0, %v1329
        %v1331 = vpop.f32.mrb[0].mxu0
        %1332 = vdwg.mxu0
        %v1334 = vsel %vm1203, %v953, 0
        %v1337 = vsel %vm1203, %v958, 0
        %v1340 = vsel %vm1203, %v963, 0
        %v1343 = vsel %vm1203, %v968, 0
        %v1346 = vsel %vm1203, %v973, 0
        %v1349 = vsel %vm1203, %v978, 0
        %v1352 = vsel %vm1203, %v983, 0
        %v1355 = vsel %vm1203, %v988, 0
        %1357 = vmatprep.subr.mxu0 0.0
        %1358 = vmatpush1.msra.mxu0 %v1195
        %1359 = vmatprep.subr.mxu0 0.0
        %1360 = vmatpush1.msra.mxu0 %v1196
        %1361 = vmatprep.subr.mxu0 0.0
        %1362 = vmatpush1.msra.mxu0 %v1197
        %1363 = vmatprep.subr.mxu0 0.0
        %1364 = vmatpush1.msra.mxu0 %v1198
        %1365 = vmatprep.subr.mxu0 0.0
        %1366 = vmatpush1.msra.mxu0 0.0
        %1367 = vmatprep.subr.mxu0 0.0
        %1368 = vmatpush1.msra.mxu0 0.0
        %1369 = vmatprep.subr.mxu0 0.0
        %1370 = vmatpush1.msra.mxu0 0.0
        %1371 = vmatprep.subr.mxu0 0.0
        %1372 = vmatpush1.msra.mxu0 0.0
        %1373 = vmatprep.subr.mxu0 0.0
        %1374 = vmatpush1.msra.mxu0 0.0
        %1375 = vmatprep.subr.mxu0 0.0
        %1376 = vmatpush1.msra.mxu0 0.0
        %1377 = vmatprep.subr.mxu0 0.0
        %1378 = vmatpush1.msra.mxu0 0.0
        %1379 = vmatprep.subr.mxu0 0.0
        %1380 = vmatpush1.msra.mxu0 0.0
        %1381 = vmatprep.subr.mxu0 0.0
        %1382 = vmatpush1.msra.mxu0 0.0
        %1383 = vmatprep.subr.mxu0 0.0
        %1384 = vmatpush1.msra.mxu0 0.0
        %1385 = vmatprep.subr.mxu0 0.0
        %1386 = vmatpush1.msra.mxu0 0.0
        %1387 = vmatprep.subr.mxu0 0.0
        %1388 = vmatpush1.msra.mxu0 0.0
        %1389 = vmatprep.subr.mxu0 0.0
        %1390 = vmatpush1.msra.mxu0 0.0
        %1391 = vmatprep.subr.mxu0 0.0
        %1392 = vmatpush1.msra.mxu0 0.0
        %1393 = vmatprep.subr.mxu0 0.0
        %1394 = vmatpush1.msra.mxu0 0.0
        %1395 = vmatprep.subr.mxu0 0.0
        %1396 = vmatpush1.msra.mxu0 0.0
        %1397 = vmatprep.subr.mxu0 0.0
        %1398 = vmatpush1.msra.mxu0 0.0
        %1399 = vmatprep.subr.mxu0 0.0
        %1400 = vmatpush1.msra.mxu0 0.0
        %1401 = vmatprep.subr.mxu0 0.0
        %1402 = vmatpush1.msra.mxu0 0.0
        %1403 = vmatprep.subr.mxu0 0.0
        %1404 = vmatpush1.msra.mxu0 0.0
        %1405 = vmatprep.subr.mxu0 0.0
        %1406 = vmatpush1.msra.mxu0 0.0
        %1407 = vmatprep.subr.mxu0 0.0
        %1408 = vmatpush1.msra.mxu0 0.0
        %1409 = vmatprep.subr.mxu0 0.0
        %1410 = vmatpush1.msra.mxu0 0.0
        %1411 = vmatprep.subr.mxu0 0.0
        %1412 = vmatpush1.msra.mxu0 0.0
        %1413 = vmatprep.subr.mxu0 0.0
        %1414 = vmatpush1.msra.mxu0 0.0
        %1415 = vmatprep.subr.mxu0 0.0
        %1416 = vmatpush1.msra.mxu0 0.0
        %1417 = vmatprep.subr.mxu0 0.0
        %1418 = vmatpush1.msra.mxu0 0.0
        %1419 = vmatprep.subr.mxu0 0.0
        %1420 = vmatpush1.msra.mxu0 0.0
        %1421 = vmatprep.mubr.f32.mxu0 0.0
        %1422 = vmatmul.mubr.f32.gmra.mrb[0].mxu0 %v1334
        %v1423 = vpop.f32.mrb[0].mxu0
        %v1424 = vadd.f32 %v1295, %v1423
        %v1425 = vpop.f32.mrb[0].mxu0
        %1426 = vmatprep.mubr.f32.mxu0 0.0
        %1427 = vmatmul.mubr.f32.gmra.mrb[0].mxu0 %v1337
        %v1428 = vpop.f32.mrb[0].mxu0
        %v1429 = vadd.f32 %v1300, %v1428
        %v1430 = vpop.f32.mrb[0].mxu0
        %1431 = vmatprep.mubr.f32.mxu0 0.0
        %1432 = vmatmul.mubr.f32.gmra.mrb[0].mxu0 %v1340
        %v1433 = vpop.f32.mrb[0].mxu0
        %v1434 = vadd.f32 %v1305, %v1433
        %v1435 = vpop.f32.mrb[0].mxu0
        %1436 = vmatprep.mubr.f32.mxu0 0.0
        %1437 = vmatmul.mubr.f32.gmra.mrb[0].mxu0 %v1343
        %v1438 = vpop.f32.mrb[0].mxu0
        %v1439 = vadd.f32 %v1310, %v1438
        %v1440 = vpop.f32.mrb[0].mxu0
        %1441 = vmatprep.mubr.f32.mxu0 0.0
        %1442 = vmatmul.mubr.f32.gmra.mrb[0].mxu0 %v1346
        %v1443 = vpop.f32.mrb[0].mxu0
        %v1444 = vadd.f32 %v1315, %v1443
        %v1445 = vpop.f32.mrb[0].mxu0
        %1446 = vmatprep.mubr.f32.mxu0 0.0
        %1447 = vmatmul.mubr.f32.gmra.mrb[0].mxu0 %v1349
        %v1448 = vpop.f32.mrb[0].mxu0
        %v1449 = vadd.f32 %v1320, %v1448
        %v1450 = vpop.f32.mrb[0].mxu0
        %1451 = vmatprep.mubr.f32.mxu0 0.0
        %1452 = vmatmul.mubr.f32.gmra.mrb[0].mxu0 %v1352
        %v1453 = vpop.f32.mrb[0].mxu0
        %v1454 = vadd.f32 %v1325, %v1453
        %v1455 = vpop.f32.mrb[0].mxu0
        %1456 = vmatprep.mubr.f32.mxu0 0.0
        %1457 = vmatmul.mubr.f32.gmra.mrb[0].mxu0 %v1355
        %v1458 = vpop.f32.mrb[0].mxu0
        %v1459 = vadd.f32 %v1330, %v1458
        %v1460 = vpop.f32.mrb[0].mxu0
        %1461 = vdwg.mxu0
        %v1462 = vld [vmem:[%s11] sm:$0x1]
        %v1463 = vld [vmem:[%s12] sm:$0x1]
        %v1464 = vsel %vm1203, %v1424, 0.0
        %1465 = vadd.xlane.f32.xlu0 %v1464
        %v1466 = vpop.xlane.xlu0 %1465
        %v1467 = vsel %vm1203, %v1429, 0.0
        %1468 = vadd.xlane.f32.xlu0 %v1467
        %v1469 = vpop.xlane.xlu0 %1468
        %v1470 = vsel %vm1203, %v1434, 0.0
        %1471 = vadd.xlane.f32.xlu0 %v1470
        %v1472 = vpop.xlane.xlu0 %1471
        %v1473 = vsel %vm1203, %v1439, 0.0
        %1474 = vadd.xlane.f32.xlu0 %v1473
        %v1475 = vpop.xlane.xlu0 %1474
        %v1476 = vsel %vm1203, %v1444, 0.0
        %1477 = vadd.xlane.f32.xlu0 %v1476
        %v1478 = vpop.xlane.xlu0 %1477
        %v1479 = vsel %vm1203, %v1449, 0.0
        %1480 = vadd.xlane.f32.xlu0 %v1479
        %v1481 = vpop.xlane.xlu0 %1480
        %v1482 = vsel %vm1203, %v1454, 0.0
        %1483 = vadd.xlane.f32.xlu0 %v1482
        %v1484 = vpop.xlane.xlu0 %1483
        %v1485 = vsel %vm1203, %v1459, 0.0
        %1486 = vadd.xlane.f32.xlu0 %v1485
        %v1487 = vpop.xlane.xlu0 %1486
        %v1488 = vrcp.pop 32.0
        %v1489 = vmul.f32 %v1466, %v1488
        %v1490 = vmul.f32 %v1469, %v1488
        %v1491 = vmul.f32 %v1472, %v1488
        %v1492 = vmul.f32 %v1475, %v1488
        %v1493 = vmul.f32 %v1478, %v1488
        %v1494 = vmul.f32 %v1481, %v1488
        %v1495 = vmul.f32 %v1484, %v1488
        %v1496 = vmul.f32 %v1487, %v1488
        %v1497 = vsub.f32 %v1424, %v1489
        %v1498 = vsub.f32 %v1429, %v1490
        %v1499 = vsub.f32 %v1434, %v1491
        %v1500 = vsub.f32 %v1439, %v1492
        %v1501 = vsub.f32 %v1444, %v1493
        %v1502 = vsub.f32 %v1449, %v1494
        %v1503 = vsub.f32 %v1454, %v1495
        %v1504 = vsub.f32 %v1459, %v1496
        %v1505 = vmul.f32 %v1497, %v1497
        %v1506 = vmul.f32 %v1498, %v1498
        %v1507 = vmul.f32 %v1499, %v1499
        %v1508 = vmul.f32 %v1500, %v1500
        %v1509 = vmul.f32 %v1501, %v1501
        %v1510 = vmul.f32 %v1502, %v1502
        %v1511 = vmul.f32 %v1503, %v1503
        %v1512 = vmul.f32 %v1504, %v1504
        %v1513 = vsel %vm1203, %v1505, 0.0
        %1514 = vadd.xlane.f32.xlu0 %v1513
        %v1515 = vpop.xlane.xlu0 %1514
        %v1516 = vsel %vm1203, %v1506, 0.0
        %1517 = vadd.xlane.f32.xlu0 %v1516
        %v1518 = vpop.xlane.xlu0 %1517
        %v1519 = vsel %vm1203, %v1507, 0.0
        %1520 = vadd.xlane.f32.xlu0 %v1519
        %v1521 = vpop.xlane.xlu0 %1520
        %v1522 = vsel %vm1203, %v1508, 0.0
        %1523 = vadd.xlane.f32.xlu0 %v1522
        %v1524 = vpop.xlane.xlu0 %1523
        %v1525 = vsel %vm1203, %v1509, 0.0
        %1526 = vadd.xlane.f32.xlu0 %v1525
        %v1527 = vpop.xlane.xlu0 %1526
        %v1528 = vsel %vm1203, %v1510, 0.0
        %1529 = vadd.xlane.f32.xlu0 %v1528
        %v1530 = vpop.xlane.xlu0 %1529
        %v1531 = vsel %vm1203, %v1511, 0.0
        %1532 = vadd.xlane.f32.xlu0 %v1531
        %v1533 = vpop.xlane.xlu0 %1532
        %v1534 = vsel %vm1203, %v1512, 0.0
        %1535 = vadd.xlane.f32.xlu0 %v1534
        %v1536 = vpop.xlane.xlu0 %1535
        %v1537 = vmul.f32 %v1515, %v1488
        %v1538 = vmul.f32 %v1518, %v1488
        %v1539 = vmul.f32 %v1521, %v1488
        %v1540 = vmul.f32 %v1524, %v1488
        %v1541 = vmul.f32 %v1527, %v1488
        %v1542 = vmul.f32 %v1530, %v1488
        %v1543 = vmul.f32 %v1533, %v1488
        %v1544 = vmul.f32 %v1536, %v1488
        %v1545 = vadd.f32 %v1537, 1e-05
        %v1546 = vadd.f32 %v1538, 1e-05
        %v1547 = vadd.f32 %v1539, 1e-05
        %v1548 = vadd.f32 %v1540, 1e-05
        %v1549 = vadd.f32 %v1541, 1e-05
        %v1550 = vadd.f32 %v1542, 1e-05
        %v1551 = vadd.f32 %v1543, 1e-05
        %v1552 = vadd.f32 %v1544, 1e-05
        %v1553 = vrsqrt.pop %v1545
        %v1554 = vrsqrt.pop %v1546
        %v1555 = vrsqrt.pop %v1547
        %v1556 = vrsqrt.pop %v1548
        %v1557 = vrsqrt.pop %v1549
        %v1558 = vrsqrt.pop %v1550
        %v1559 = vrsqrt.pop %v1551
        %v1560 = vrsqrt.pop %v1552
        %v1561 = vmul.f32 %v1497, %v1553
        %v1562 = vmul.f32 %v1498, %v1554
        %v1563 = vmul.f32 %v1499, %v1555
        %v1564 = vmul.f32 %v1500, %v1556
        %v1565 = vmul.f32 %v1501, %v1557
        %v1566 = vmul.f32 %v1502, %v1558
        %v1567 = vmul.f32 %v1503, %v1559
        %v1568 = vmul.f32 %v1504, %v1560
        %v1570 = vlaneseq
        %v1571 = vshrl.u32 %v1570, 7
        %v1572 = vsub.s32 0, %v1571
        %v1573 = vrot.slane %v1462, %v1572
        %v1575 = vmul.f32 %v1561, %v1573
        %v1576 = vmul.f32 %v1562, %v1573
        %v1577 = vmul.f32 %v1563, %v1573
        %v1578 = vmul.f32 %v1564, %v1573
        %v1579 = vmul.f32 %v1565, %v1573
        %v1580 = vmul.f32 %v1566, %v1573
        %v1581 = vmul.f32 %v1567, %v1573
        %v1582 = vmul.f32 %v1568, %v1573
        %v1584 = vlaneseq
        %v1585 = vshrl.u32 %v1584, 7
        %v1586 = vsub.s32 0, %v1585
        %v1587 = vrot.slane %v1463, %v1586
        %v1589 = vadd.f32 %v1575, %v1587
        %v1590 = vadd.f32 %v1576, %v1587
        %v1591 = vadd.f32 %v1577, %v1587
        %v1592 = vadd.f32 %v1578, %v1587
        %v1593 = vadd.f32 %v1579, %v1587
        %v1594 = vadd.f32 %v1580, %v1587
        %v1595 = vadd.f32 %v1581, %v1587
        %v1596 = vadd.f32 %v1582, %v1587
        %v1597 = vld [vmem:[%s13] sm:$0x1]
        %v1598 = vld [vmem:[%s14] sm:$0x1]
        %v1599 = vsel %vm1203, %v1589, 0.0
        %1600 = vadd.xlane.f32.xlu0 %v1599
        %v1601 = vpop.xlane.xlu0 %1600
        %v1602 = vsel %vm1203, %v1590, 0.0
        %1603 = vadd.xlane.f32.xlu0 %v1602
        %v1604 = vpop.xlane.xlu0 %1603
        %v1605 = vsel %vm1203, %v1591, 0.0
        %1606 = vadd.xlane.f32.xlu0 %v1605
        %v1607 = vpop.xlane.xlu0 %1606
        %v1608 = vsel %vm1203, %v1592, 0.0
        %1609 = vadd.xlane.f32.xlu0 %v1608
        %v1610 = vpop.xlane.xlu0 %1609
        %v1611 = vsel %vm1203, %v1593, 0.0
        %1612 = vadd.xlane.f32.xlu0 %v1611
        %v1613 = vpop.xlane.xlu0 %1612
        %v1614 = vsel %vm1203, %v1594, 0.0
        %1615 = vadd.xlane.f32.xlu0 %v1614
        %v1616 = vpop.xlane.xlu0 %1615
        %v1617 = vsel %vm1203, %v1595, 0.0
        %1618 = vadd.xlane.f32.xlu0 %v1617
        %v1619 = vpop.xlane.xlu0 %1618
        %v1620 = vsel %vm1203, %v1596, 0.0
        %1621 = vadd.xlane.f32.xlu0 %v1620
        %v1622 = vpop.xlane.xlu0 %1621
        %v1623 = vmul.f32 %v1601, %v1488
        %v1624 = vmul.f32 %v1604, %v1488
        %v1625 = vmul.f32 %v1607, %v1488
        %v1626 = vmul.f32 %v1610, %v1488
        %v1627 = vmul.f32 %v1613, %v1488
        %v1628 = vmul.f32 %v1616, %v1488
        %v1629 = vmul.f32 %v1619, %v1488
        %v1630 = vmul.f32 %v1622, %v1488
        %v1631 = vsub.f32 %v1589, %v1623
        %v1632 = vsub.f32 %v1590, %v1624
        %v1633 = vsub.f32 %v1591, %v1625
        %v1634 = vsub.f32 %v1592, %v1626
        %v1635 = vsub.f32 %v1593, %v1627
        %v1636 = vsub.f32 %v1594, %v1628
        %v1637 = vsub.f32 %v1595, %v1629
        %v1638 = vsub.f32 %v1596, %v1630
        %v1639 = vmul.f32 %v1631, %v1631
        %v1640 = vmul.f32 %v1632, %v1632
        %v1641 = vmul.f32 %v1633, %v1633
        %v1642 = vmul.f32 %v1634, %v1634
        %v1643 = vmul.f32 %v1635, %v1635
        %v1644 = vmul.f32 %v1636, %v1636
        %v1645 = vmul.f32 %v1637, %v1637
        %v1646 = vmul.f32 %v1638, %v1638
        %v1647 = vsel %vm1203, %v1639, 0.0
        %1648 = vadd.xlane.f32.xlu0 %v1647
        %v1649 = vpop.xlane.xlu0 %1648
        %v1650 = vsel %vm1203, %v1640, 0.0
        %1651 = vadd.xlane.f32.xlu0 %v1650
        %v1652 = vpop.xlane.xlu0 %1651
        %v1653 = vsel %vm1203, %v1641, 0.0
        %1654 = vadd.xlane.f32.xlu0 %v1653
        %v1655 = vpop.xlane.xlu0 %1654
        %v1656 = vsel %vm1203, %v1642, 0.0
        %1657 = vadd.xlane.f32.xlu0 %v1656
        %v1658 = vpop.xlane.xlu0 %1657
        %v1659 = vsel %vm1203, %v1643, 0.0
        %1660 = vadd.xlane.f32.xlu0 %v1659
        %v1661 = vpop.xlane.xlu0 %1660
        %v1662 = vsel %vm1203, %v1644, 0.0
        %1663 = vadd.xlane.f32.xlu0 %v1662
        %v1664 = vpop.xlane.xlu0 %1663
        %v1665 = vsel %vm1203, %v1645, 0.0
        %1666 = vadd.xlane.f32.xlu0 %v1665
        %v1667 = vpop.xlane.xlu0 %1666
        %v1668 = vsel %vm1203, %v1646, 0.0
        %1669 = vadd.xlane.f32.xlu0 %v1668
        %v1670 = vpop.xlane.xlu0 %1669
        %v1671 = vmul.f32 %v1649, %v1488
        %v1672 = vmul.f32 %v1652, %v1488
        %v1673 = vmul.f32 %v1655, %v1488
        %v1674 = vmul.f32 %v1658, %v1488
        %v1675 = vmul.f32 %v1661, %v1488
        %v1676 = vmul.f32 %v1664, %v1488
        %v1677 = vmul.f32 %v1667, %v1488
        %v1678 = vmul.f32 %v1670, %v1488
        %v1679 = vadd.f32 %v1671, 1e-05
        %v1680 = vadd.f32 %v1672, 1e-05
        %v1681 = vadd.f32 %v1673, 1e-05
        %v1682 = vadd.f32 %v1674, 1e-05
        %v1683 = vadd.f32 %v1675, 1e-05
        %v1684 = vadd.f32 %v1676, 1e-05
        %v1685 = vadd.f32 %v1677, 1e-05
        %v1686 = vadd.f32 %v1678, 1e-05
        %v1687 = vrsqrt.pop %v1679
        %v1688 = vrsqrt.pop %v1680
        %v1689 = vrsqrt.pop %v1681
        %v1690 = vrsqrt.pop %v1682
        %v1691 = vrsqrt.pop %v1683
        %v1692 = vrsqrt.pop %v1684
        %v1693 = vrsqrt.pop %v1685
        %v1694 = vrsqrt.pop %v1686
        %v1695 = vmul.f32 %v1631, %v1687
        %v1696 = vmul.f32 %v1632, %v1688
        %v1697 = vmul.f32 %v1633, %v1689
        %v1698 = vmul.f32 %v1634, %v1690
        %v1699 = vmul.f32 %v1635, %v1691
        %v1700 = vmul.f32 %v1636, %v1692
        %v1701 = vmul.f32 %v1637, %v1693
        %v1702 = vmul.f32 %v1638, %v1694
        %v1704 = vlaneseq
        %v1705 = vshrl.u32 %v1704, 7
        %v1706 = vsub.s32 0, %v1705
        %v1707 = vrot.slane %v1597, %v1706
        %v1709 = vmul.f32 %v1695, %v1707
        %v1710 = vmul.f32 %v1696, %v1707
        %v1711 = vmul.f32 %v1697, %v1707
        %v1712 = vmul.f32 %v1698, %v1707
        %v1713 = vmul.f32 %v1699, %v1707
        %v1714 = vmul.f32 %v1700, %v1707
        %v1715 = vmul.f32 %v1701, %v1707
        %v1716 = vmul.f32 %v1702, %v1707
        %v1718 = vlaneseq
        %v1719 = vshrl.u32 %v1718, 7
        %v1720 = vsub.s32 0, %v1719
        %v1721 = vrot.slane %v1598, %v1720
        %v1723 = vadd.f32 %v1709, %v1721
        %v1724 = vadd.f32 %v1710, %v1721
        %v1725 = vadd.f32 %v1711, %v1721
        %v1726 = vadd.f32 %v1712, %v1721
        %v1727 = vadd.f32 %v1713, %v1721
        %v1728 = vadd.f32 %v1714, %v1721
        %v1729 = vadd.f32 %v1715, %v1721
        %v1730 = vadd.f32 %v1716, %v1721
        %v1731 = vld [vmem:[%s15] sm:$0xff]
        %v1732 = vld [vmem:[%s15 + $0x8] sm:$0xff]
        %v1733 = vld [vmem:[%s15 + $0x10] sm:$0xff]
        %v1734 = vld [vmem:[%s15 + $0x18] sm:$0xff]
        %v1735 = vld [vmem:[%s16] sm:$0x1]
        %v1737 = vlaneseq
        %v1738 = vshrl.u32 %v1737, 7
        %v1739 = vsub.s32 0, %v1738
        %v1740 = vrot.slane %v1735, %v1739
        %v1743 = vsel %vm1203, %v1723, 0
        %v1746 = vsel %vm1203, %v1724, 0
        %v1749 = vsel %vm1203, %v1725, 0
        %v1752 = vsel %vm1203, %v1726, 0
        %v1755 = vsel %vm1203, %v1727, 0
        %v1758 = vsel %vm1203, %v1728, 0
        %v1761 = vsel %vm1203, %v1729, 0
        %v1764 = vsel %vm1203, %v1730, 0
        %1766 = vmatprep.subr.mxu0 0.0
        %1767 = vmatpush1.msra.mxu0 %v1731
        %1768 = vmatprep.subr.mxu0 0.0
        %1769 = vmatpush1.msra.mxu0 %v1732
        %1770 = vmatprep.subr.mxu0 0.0
        %1771 = vmatpush1.msra.mxu0 %v1733
        %1772 = vmatprep.subr.mxu0 0.0
        %1773 = vmatpush1.msra.mxu0 %v1734
        %1774 = vmatprep.subr.mxu0 0.0
        %1775 = vmatpush1.msra.mxu0 0.0
        %1776 = vmatprep.subr.mxu0 0.0
        %1777 = vmatpush1.msra.mxu0 0.0
        %1778 = vmatprep.subr.mxu0 0.0
        %1779 = vmatpush1.msra.mxu0 0.0
        %1780 = vmatprep.subr.mxu0 0.0
        %1781 = vmatpush1.msra.mxu0 0.0
        %1782 = vmatprep.subr.mxu0 0.0
        %1783 = vmatpush1.msra.mxu0 0.0
        %1784 = vmatprep.subr.mxu0 0.0
        %1785 = vmatpush1.msra.mxu0 0.0
        %1786 = vmatprep.subr.mxu0 0.0
        %1787 = vmatpush1.msra.mxu0 0.0
        %1788 = vmatprep.subr.mxu0 0.0
        %1789 = vmatpush1.msra.mxu0 0.0
        %1790 = vmatprep.subr.mxu0 0.0
        %1791 = vmatpush1.msra.mxu0 0.0
        %1792 = vmatprep.subr.mxu0 0.0
        %1793 = vmatpush1.msra.mxu0 0.0
        %1794 = vmatprep.subr.mxu0 0.0
        %1795 = vmatpush1.msra.mxu0 0.0
        %1796 = vmatprep.subr.mxu0 0.0
        %1797 = vmatpush1.msra.mxu0 0.0
        %1798 = vmatprep.subr.mxu0 0.0
        %1799 = vmatpush1.msra.mxu0 0.0
        %1800 = vmatprep.subr.mxu0 0.0
        %1801 = vmatpush1.msra.mxu0 0.0
        %1802 = vmatprep.subr.mxu0 0.0
        %1803 = vmatpush1.msra.mxu0 0.0
        %1804 = vmatprep.subr.mxu0 0.0
        %1805 = vmatpush1.msra.mxu0 0.0
        %1806 = vmatprep.subr.mxu0 0.0
        %1807 = vmatpush1.msra.mxu0 0.0
        %1808 = vmatprep.subr.mxu0 0.0
        %1809 = vmatpush1.msra.mxu0 0.0
        %1810 = vmatprep.subr.mxu0 0.0
        %1811 = vmatpush1.msra.mxu0 0.0
        %1812 = vmatprep.subr.mxu0 0.0
        %1813 = vmatpush1.msra.mxu0 0.0
        %1814 = vmatprep.subr.mxu0 0.0
        %1815 = vmatpush1.msra.mxu0 0.0
        %1816 = vmatprep.subr.mxu0 0.0
        %1817 = vmatpush1.msra.mxu0 0.0
        %1818 = vmatprep.subr.mxu0 0.0
        %1819 = vmatpush1.msra.mxu0 0.0
        %1820 = vmatprep.subr.mxu0 0.0
        %1821 = vmatpush1.msra.mxu0 0.0
        %1822 = vmatprep.subr.mxu0 0.0
        %1823 = vmatpush1.msra.mxu0 0.0
        %1824 = vmatprep.subr.mxu0 0.0
        %1825 = vmatpush1.msra.mxu0 0.0
        %1826 = vmatprep.subr.mxu0 0.0
        %1827 = vmatpush1.msra.mxu0 0.0
        %1828 = vmatprep.subr.mxu0 0.0
        %1829 = vmatpush1.msra.mxu0 0.0
        %1830 = vmatprep.mubr.f32.mxu0 0.0
        %1831 = vmatmul.mubr.f32.gmra.mrb[0].mxu0 %v1743
        %v1832 = vpop.f32.mrb[0].mxu0
        %v1833 = vadd.f32 %v1740, %v1832
        %v1834 = vpop.f32.mrb[0].mxu0
        %1835 = vmatprep.mubr.f32.mxu0 0.0
        %1836 = vmatmul.mubr.f32.gmra.mrb[0].mxu0 %v1746
        %v1837 = vpop.f32.mrb[0].mxu0
        %v1838 = vadd.f32 %v1740, %v1837
        %v1839 = vpop.f32.mrb[0].mxu0
        %1840 = vmatprep.mubr.f32.mxu0 0.0
        %1841 = vmatmul.mubr.f32.gmra.mrb[0].mxu0 %v1749
        %v1842 = vpop.f32.mrb[0].mxu0
        %v1843 = vadd.f32 %v1740, %v1842
        %v1844 = vpop.f32.mrb[0].mxu0
        %1845 = vmatprep.mubr.f32.mxu0 0.0
        %1846 = vmatmul.mubr.f32.gmra.mrb[0].mxu0 %v1752
        %v1847 = vpop.f32.mrb[0].mxu0
        %v1848 = vadd.f32 %v1740, %v1847
        %v1849 = vpop.f32.mrb[0].mxu0
        %1850 = vmatprep.mubr.f32.mxu0 0.0
        %1851 = vmatmul.mubr.f32.gmra.mrb[0].mxu0 %v1755
        %v1852 = vpop.f32.mrb[0].mxu0
        %v1853 = vadd.f32 %v1740, %v1852
        %v1854 = vpop.f32.mrb[0].mxu0
        %1855 = vmatprep.mubr.f32.mxu0 0.0
        %1856 = vmatmul.mubr.f32.gmra.mrb[0].mxu0 %v1758
        %v1857 = vpop.f32.mrb[0].mxu0
        %v1858 = vadd.f32 %v1740, %v1857
        %v1859 = vpop.f32.mrb[0].mxu0
        %1860 = vmatprep.mubr.f32.mxu0 0.0
        %1861 = vmatmul.mubr.f32.gmra.mrb[0].mxu0 %v1761
        %v1862 = vpop.f32.mrb[0].mxu0
        %v1863 = vadd.f32 %v1740, %v1862
        %v1864 = vpop.f32.mrb[0].mxu0
        %1865 = vmatprep.mubr.f32.mxu0 0.0
        %1866 = vmatmul.mubr.f32.gmra.mrb[0].mxu0 %v1764
        %v1867 = vpop.f32.mrb[0].mxu0
        %v1868 = vadd.f32 %v1740, %v1867
        %v1869 = vpop.f32.mrb[0].mxu0
        %1870 = vdwg.mxu0
        %1879 = vrot.lane.b32.xlu0 %v1833, 32
        %v1880 = vpop.permute.xlu0 %1879
        %1881 = vrot.lane.b32.xlu0 %v1838, 32
        %v1882 = vpop.permute.xlu0 %1881
        %1883 = vrot.lane.b32.xlu0 %v1843, 32
        %v1884 = vpop.permute.xlu0 %1883
        %1885 = vrot.lane.b32.xlu0 %v1848, 32
        %v1886 = vpop.permute.xlu0 %1885
        %1887 = vrot.lane.b32.xlu0 %v1853, 32
        %v1888 = vpop.permute.xlu0 %1887
        %1889 = vrot.lane.b32.xlu0 %v1858, 32
        %v1890 = vpop.permute.xlu0 %1889
        %1891 = vrot.lane.b32.xlu0 %v1863, 32
        %v1892 = vpop.permute.xlu0 %1891
        %1893 = vrot.lane.b32.xlu0 %v1868, 32
        %v1894 = vpop.permute.xlu0 %1893
        %v1903 = vsel %vm1203, %v1589, %v1880
        %v1904 = vsel %vm1203, %v1590, %v1882
        %v1905 = vsel %vm1203, %v1591, %v1884
        %v1906 = vsel %vm1203, %v1592, %v1886
        %v1907 = vsel %vm1203, %v1593, %v1888
        %v1908 = vsel %vm1203, %v1594, %v1890
        %v1909 = vsel %vm1203, %v1595, %v1892
        %v1910 = vsel %vm1203, %v1596, %v1894
        %1911 = vst [vmem:[%s592] sm:$0xff] %v1903
        %1912 = vst [vmem:[%s592 + $0x8] sm:$0xff] %v1904
        %1913 = vst [vmem:[%s592 + $0x10] sm:$0xff] %v1905
        %1914 = vst [vmem:[%s592 + $0x18] sm:$0xff] %v1906
        %1915 = vst [vmem:[%s592 + $0x20] sm:$0xff] %v1907
        %1916 = vst [vmem:[%s592 + $0x28] sm:$0xff] %v1908
        %1917 = vst [vmem:[%s592 + $0x30] sm:$0xff] %v1909
        %1918 = vst [vmem:[%s592 + $0x38] sm:$0xff] %v1910
        %s1919 = sand.u32 %s424, 1
        %s1920 = scalar_lea.sflag [#allocation3], %s1919
        %s1921 = sand.u32 %s424, 1
        %s1922 = smul.addr %s1921, 64
        %s1923 = scalar_lea.vmem [#allocation2], %s1922
        // Predicated region
        $region89: #{tpu_custom_call.1} parent=87 // pred_check
          %p1924 = pneg %p434
        $region90: #{tpu_custom_call.1} parent=87 // pred_check_branch
          %1926 = sbr.rel (%p1924) target = $region92
        $region91: #{tpu_custom_call.1} parent=87 // pred_region
          %s1927 = smul.u32 8, %s36
          %s1929 = ssub.s32 1024, 1024
          %1930 = vsyncadd %s1920, %s1929
          %s1931 = smul.addr %s35, 8
          %s1932 = sadd.s32 %s1927, %s1931
          %s1933 = smul.addr %s1932, 128
          %s1934 = scalar_lea.hbm %s17, %s1933
          %s1935 = sshll.u32 %s1923, 4
          %s1936 = int_to_ptr.vmem [resolvable:$true] %s1935
          %1941 = dma.vmem_to_hbm [thread:$0]  %s1936, 1024, %s1934, %s1920, 128, 128, 8
        $region92: #{tpu_custom_call.1} parent=87 // pred_fallthru
          _
      $region88: #{tpu_custom_call.1} parent=5 // pred_fallthru
        _
      %p1942 = scmp.le.s32.totalorder 2, %s26
      // Predicated region
      $region93: #{tpu_custom_call.1} parent=5 // pred_check
        %p1943 = pneg %p1942
      $region94: #{tpu_custom_call.1} parent=5 // pred_check_branch
        %1945 = sbr.rel (%p1943) target = $region96
      $region95: #{tpu_custom_call.1} parent=5 // pred_region
        %s1946 = ssub.s32 %s26, 2
        // Predicated region
        $region97: #{tpu_custom_call.1} parent=95 // pred_check
          %p1947 = pneg %p440
        $region98: #{tpu_custom_call.1} parent=95 // pred_check_branch
          %1949 = sbr.rel (%p1947) target = $region100
        $region99: #{tpu_custom_call.1} parent=95 // pred_region
          %s1950 = sand.u32 %s425, 1
          %s1951 = scalar_lea.sflag [#allocation3], %s1950
          %s1952 = sand.u32 %s425, 1
          %s1953 = smul.addr %s1952, 64
          %s1954 = scalar_lea.vmem [#allocation2], %s1953
          %1955 = dma.done %s1951, 1024
        $region100: #{tpu_custom_call.1} parent=95 // pred_fallthru
          _
      $region96: #{tpu_custom_call.1} parent=5 // pred_fallthru
        _
    $region6: #{tpu_custom_call.1} parent=1 // loop_footer
      %s30 = sadd.s32 1, %s26
    $region7: #{tpu_custom_call.1} parent=1 // loop_footer_branch
      %25 = sbr.rel target = $region3
    $region8: #{tpu_custom_call.1} parent=1 // loop_exit
      _
    %1956 = vsyncpa [#allocation3], 1
    %s1957 = scalar_lea.sflag [#allocation3], 1
    %1958 = vsyncpa %s1957, 1

</llo_original>
